<compile_context>
chip_gen: v7x
topology: tpu7x:2x2x1
jax: 0.10.0
libtpu: 0.0.40
codegen_flags: <defaults>
</compile_context>

<pallas_src>
import jax
import jax.numpy as jnp
import numpy as np
from jax.experimental import pallas as pl
from jax.experimental.pallas import tpu as pltpu


def _cdiv(a, b):
    return (a + b - 1) // b


def _round_up(a, m):
    return _cdiv(a, m) * m


def _block_diag(w, g):
    """(K, N) -> (g*K, g*N) block-diagonal with g copies of w on the diagonal."""
    if g == 1:
        return w
    k, n = w.shape
    eye = jnp.eye(g, dtype=w.dtype)
    return (eye[:, None, :, None] * w[None, :, None, :]).reshape(g * k, g * n)


def sfu_kernel(x_ref, f_ref, wx_ref, wf_ref, b_ref, o_ref):
    # x_ref: (tm, G*D)      row tile of (lane-packed) input
    # f_ref: (tm, G*F)      row tile of (lane-packed) fusion vectors
    # wx_ref: (G*D, 2*G*D)  fused [r | g] weights for the x half (block-diag over G)
    # wf_ref: (G*F, 2*G*D)  fused [r | g] weights for the fusion half
    # b_ref: (1, 2*G*D)     fused [r | g] bias (f32)
    # o_ref: (tm, G*D)      output tile
    x = x_ref[...]
    f = f_ref[...]
    x_f32 = x.astype(jnp.float32)

    # Full-precision f32 matmul passes for f32 inputs; bf16 inputs are already exact
    # on the MXU, accumulation stays f32 via preferred_element_type.
    prec = (jax.lax.Precision.HIGHEST if x.dtype == jnp.float32
            else jax.lax.Precision.DEFAULT)
    pre = (jnp.dot(x, wx_ref[...], preferred_element_type=jnp.float32, precision=prec)
           + jnp.dot(f, wf_ref[...], preferred_element_type=jnp.float32, precision=prec)
           + b_ref[...])

    dg = o_ref.shape[-1]                    # = G*D; a multiple of 128 when lane-packed
    r = jnp.tanh(pre[:, :dg])
    g = 0.5 * jnp.tanh(0.5 * pre[:, dg:]) + 0.5   # sigmoid via tanh: 1 EUP push/vreg
    # o = g*r + (1-g)*x  ==  x + g*(r - x)   (one fewer vector multiply)
    o_ref[...] = (x_f32 + g * (r - x_f32)).astype(o_ref.dtype)


def sfu_pallas(x, fusions, w_r, b_r, w_g, b_g, *, vmem_tile_budget_bytes=24 << 20):
    """x: (B, S, D); fusions: (B, S, F); w_*: (D, D+F) torch-style; b_*: (D,)."""
    B, S, D = x.shape
    F = fusions.shape[-1]
    rows = B * S
    out_dtype = x.dtype

    # Lane-packing factor: fold G row-groups into the lane axis when D < 128.
    G = (128 // D) if (D < 128 and 128 % D == 0) else 1
    Dp, Fp = G * D, G * F

    # ---- weight prep (once per call; fold into init / jit constant for production) --
    # Split over the concat boundary (rf @ W.T == x @ Wx + f @ Wf) and fuse the r/g
    # projections along the output (lane) axis; block-diagonal over the G row-groups.
    wr_x = jnp.transpose(w_r[:, :D])
    wr_f = jnp.transpose(w_r[:, D:])
    wg_x = jnp.transpose(w_g[:, :D])
    wg_f = jnp.transpose(w_g[:, D:])
    wx = jnp.concatenate([_block_diag(wr_x, G), _block_diag(wg_x, G)], axis=1)  # (Dp, 2Dp)
    wf = jnp.concatenate([_block_diag(wr_f, G), _block_diag(wg_f, G)], axis=1)  # (Fp, 2Dp)
    bias = jnp.concatenate([jnp.tile(b_r, G), jnp.tile(b_g, G)]).reshape(1, 2 * Dp)
    bias = bias.astype(jnp.float32)

    # ---- activations: flatten rows, pad to a multiple of G, fold groups into lanes --
    x2 = x.reshape(rows, D)
    f2 = fusions.reshape(rows, F)
    rows_g = _round_up(rows, G)
    if rows_g != rows:
        x2 = jnp.pad(x2, ((0, rows_g - rows), (0, 0)))
        f2 = jnp.pad(f2, ((0, rows_g - rows), (0, 0)))
    R = rows_g // G
    x2 = x2.reshape(R, Dp)
    f2 = f2.reshape(R, Fp)

    # ---- row tile size from a VMEM byte budget (streamed tiles are double-buffered) -
    in_bytes = x2.dtype.itemsize
    out_bytes = jnp.dtype(out_dtype).itemsize
    row_bytes = 2 * (Dp * in_bytes + Fp * in_bytes + Dp * out_bytes)
    sub = 8 * (4 // min(in_bytes, out_bytes))          # sublane multiple: 8/16/32
    tm_cap = max(sub, (vmem_tile_budget_bytes // max(row_bytes, 1)) // sub * sub)
    # Keep >= 2 row tiles (when enough rows) so both v7x TensorCores get work.
    n_tiles = max(_cdiv(R, tm_cap), 2 if R >= 2 * sub else 1)
    tm = min(_round_up(_cdiv(R, n_tiles), sub), _round_up(R, sub))
    R_pad = _round_up(R, tm)
    if R_pad != R:
        x2 = jnp.pad(x2, ((0, R_pad - R), (0, 0)))
        f2 = jnp.pad(f2, ((0, R_pad - R), (0, 0)))
    grid = (R_pad // tm,)

    # Explicit scoped-VMEM limit (defaults are 16/32 MiB; stay well under v7x's 64 MiB
    # physical). Weights are double-buffered by default -> count them at 2x.
    w_bytes = 2 * (wx.size * wx.dtype.itemsize + wf.size * wf.dtype.itemsize
                   + bias.size * 4)
    vmem_limit = int(min(max(tm * row_bytes + w_bytes + (8 << 20), 32 << 20), 56 << 20))

    out = pl.pallas_call(
        sfu_kernel,
        out_shape=jax.ShapeDtypeStruct((R_pad, Dp), out_dtype),
        grid_spec=pltpu.PrefetchScalarGridSpec(
            num_scalar_prefetch=0,
            grid=grid,
            in_specs=[
                pl.BlockSpec((tm, Dp), lambda i: (i, 0)),        # x tile (streamed)
                pl.BlockSpec((tm, Fp), lambda i: (i, 0)),        # fusions tile (streamed)
                pl.BlockSpec((Dp, 2 * Dp), lambda i: (0, 0)),    # fused Wx (VMEM-resident)
                pl.BlockSpec((Fp, 2 * Dp), lambda i: (0, 0)),    # fused Wf (VMEM-resident)
                pl.BlockSpec((1, 2 * Dp), lambda i: (0, 0)),     # fused bias
            ],
            out_specs=pl.BlockSpec((tm, Dp), lambda i: (i, 0)),
        ),
        compiler_params=pltpu.CompilerParams(
            dimension_semantics=("parallel",),   # rows independent -> megacore on v7x
            vmem_limit_bytes=vmem_limit,
        ),
    )(x2, f2, wx, wf, bias)

    # Unpack lanes -> rows, drop padding, restore (B, S, D).
    return out[:R].reshape(rows_g, D)[:rows].reshape(B, S, D)


def sfu_reference_np(x, fusions, w_r, b_r, w_g, b_g):
    """float64 numpy reference (independent of XLA matmul-precision defaults)."""
    x64 = np.asarray(x, np.float64)
    f64 = np.asarray(fusions, np.float64)
    rf = np.concatenate([x64, f64], axis=2)
    r = np.tanh(rf @ np.asarray(w_r, np.float64).T + np.asarray(b_r, np.float64))
    z = rf @ np.asarray(w_g, np.float64).T + np.asarray(b_g, np.float64)
    g = 1.0 / (1.0 + np.exp(-z))
    return g * r + (1.0 - g) * x64


if __name__ == "__main__":
    # Small deterministic shapes: batch=2, seq=8, input_size=32, fusion_size=32
    B, S, D, F = 2, 8, 32, 32

    key = jax.random.PRNGKey(0)
    kx, kf, kwr, kbr, kwg, kbg = jax.random.split(key, 6)

    x = jax.random.normal(kx, (B, S, D), dtype=jnp.float32)
    fusions = jax.random.normal(kf, (B, S, F), dtype=jnp.float32)

    # nn.Linear(input_size + fusion_size, input_size): weight (D, D+F), bias (D,)
    bound = 1.0 / np.sqrt(D + F)
    w_r = jax.random.uniform(kwr, (D, D + F), minval=-bound, maxval=bound, dtype=jnp.float32)
    b_r = jax.random.uniform(kbr, (D,), minval=-bound, maxval=bound, dtype=jnp.float32)
    w_g = jax.random.uniform(kwg, (D, D + F), minval=-bound, maxval=bound, dtype=jnp.float32)
    b_g = jax.random.uniform(kbg, (D,), minval=-bound, maxval=bound, dtype=jnp.float32)

    ref = sfu_reference_np(x, fusions, w_r, b_r, w_g, b_g)

    # f32 path
    out = jax.block_until_ready(sfu_pallas(x, fusions, w_r, b_r, w_g, b_g))
    np.testing.assert_allclose(np.asarray(out, np.float64), ref, rtol=1e-5, atol=1e-5)

    # bf16 streaming path (activations + weights bf16; accumulation / gating stay f32)
    out_bf16 = jax.block_until_ready(
        sfu_pallas(x.astype(jnp.bfloat16), fusions.astype(jnp.bfloat16),
                   w_r.astype(jnp.bfloat16), b_r, w_g.astype(jnp.bfloat16), b_g))
    np.testing.assert_allclose(np.asarray(out_bf16, np.float64), ref, rtol=5e-2, atol=5e-2)

    print("KERNEL_OK")
</pallas_src>

<mosaic_0001>
module attributes {stable_mosaic.version = 11 : i64} {
  func.func @sfu_kernel(%arg0: i32, %arg1: memref<8x128xf32, #tpu.memory_space<vmem>>, %arg2: memref<8x128xf32, #tpu.memory_space<vmem>>, %arg3: memref<128x256xf32, #tpu.memory_space<vmem>>, %arg4: memref<128x256xf32, #tpu.memory_space<vmem>>, %arg5: memref<1x256xf32, #tpu.memory_space<vmem>>, %arg6: memref<8x128xf32, #tpu.memory_space<vmem>>) attributes {dimension_semantics = [#tpu.dimension_semantics<parallel>], iteration_bounds = array<i64: 1>, scalar_prefetch = 0 : i64, scratch_operands = 0 : i64, tpu.core_type = #tpu.core_type<tc>, window_params = [{transform_indices = @transform_0, window_bounds = array<i64: 8, 128>}, {transform_indices = @transform_1, window_bounds = array<i64: 8, 128>}, {pipeline_mode = #tpu.pipeline_mode<synchronous>, transform_indices = @transform_2, window_bounds = array<i64: 128, 256>}, {pipeline_mode = #tpu.pipeline_mode<synchronous>, transform_indices = @transform_3, window_bounds = array<i64: 128, 256>}, {pipeline_mode = #tpu.pipeline_mode<synchronous>, transform_indices = @transform_4, window_bounds = array<i64: 1, 256>}, {transform_indices = @transform_5, window_bounds = array<i64: 8, 128>}]} {
    %c0 = arith.constant 0 : index
    %c0_0 = arith.constant 0 : index
    %0 = vector.load %arg1[%c0, %c0_0] : memref<8x128xf32, #tpu.memory_space<vmem>>, vector<8x128xf32>
    %c0_1 = arith.constant 0 : index
    %c0_2 = arith.constant 0 : index
    %1 = vector.load %arg2[%c0_1, %c0_2] : memref<8x128xf32, #tpu.memory_space<vmem>>, vector<8x128xf32>
    %c0_3 = arith.constant 0 : index
    %c0_4 = arith.constant 0 : index
    %2 = vector.load %arg3[%c0_3, %c0_4] : memref<128x256xf32, #tpu.memory_space<vmem>>, vector<128x256xf32>
    %cst = arith.constant dense<0.000000e+00> : vector<8x256xf32>
    %3 = tpu.matmul %0, %2, %cst {dimension_numbers = #tpu.dot_dimension_numbers<[1], [0], [0], [1], [0, 0, 1, 1], [], []>, precision = #tpu.contract_precision<fp32>} : vector<8x128xf32>, vector<128x256xf32>, vector<8x256xf32> -> vector<8x256xf32>
    %c0_5 = arith.constant 0 : index
    %c0_6 = arith.constant 0 : index
    %4 = vector.load %arg4[%c0_5, %c0_6] : memref<128x256xf32, #tpu.memory_space<vmem>>, vector<128x256xf32>
    %cst_7 = arith.constant dense<0.000000e+00> : vector<8x256xf32>
    %5 = tpu.matmul %1, %4, %cst_7 {dimension_numbers = #tpu.dot_dimension_numbers<[1], [0], [0], [1], [0, 0, 1, 1], [], []>, precision = #tpu.contract_precision<fp32>} : vector<8x128xf32>, vector<128x256xf32>, vector<8x256xf32> -> vector<8x256xf32>
    %6 = arith.addf %3, %5 : vector<8x256xf32>
    %c0_8 = arith.constant 0 : index
    %c0_9 = arith.constant 0 : index
    %7 = vector.load %arg5[%c0_8, %c0_9] : memref<1x256xf32, #tpu.memory_space<vmem>>, vector<1x256xf32>
    %8 = vector.broadcast %7 : vector<1x256xf32> to vector<8x256xf32>
    %9 = arith.addf %6, %8 : vector<8x256xf32>
    %10 = vector.extract_strided_slice %9 {offsets = [0, 0], sizes = [8, 128], strides = [1, 1]} : vector<8x256xf32> to vector<8x128xf32>
    %11 = math.tanh %10 : vector<8x128xf32>
    %12 = vector.extract_strided_slice %9 {offsets = [0, 128], sizes = [8, 128], strides = [1, 1]} : vector<8x256xf32> to vector<8x128xf32>
    %cst_10 = arith.constant 5.000000e-01 : f32
    %13 = vector.broadcast %cst_10 : f32 to vector<8x128xf32>
    %14 = arith.mulf %13, %12 : vector<8x128xf32>
    %15 = math.tanh %14 : vector<8x128xf32>
    %cst_11 = arith.constant 5.000000e-01 : f32
    %16 = vector.broadcast %cst_11 : f32 to vector<8x128xf32>
    %17 = arith.mulf %16, %15 : vector<8x128xf32>
    %cst_12 = arith.constant 5.000000e-01 : f32
    %18 = vector.broadcast %cst_12 : f32 to vector<8x128xf32>
    %19 = arith.addf %17, %18 : vector<8x128xf32>
    %20 = arith.subf %11, %0 : vector<8x128xf32>
    %21 = arith.mulf %19, %20 : vector<8x128xf32>
    %22 = arith.addf %0, %21 : vector<8x128xf32>
    %c0_13 = arith.constant 0 : index
    %c0_14 = arith.constant 0 : index
    %23 = vector.load %arg6[%c0_13, %c0_14] : memref<8x128xf32, #tpu.memory_space<vmem>>, vector<8x128xf32>
    tpu.vector_store %arg6[%c0_13, %c0_14], %22 {strides = array<i32>} : memref<8x128xf32, #tpu.memory_space<vmem>>, vector<8x128xf32>,
    return
  }
  func.func @transform_0(%arg0: i32) -> (i32, i32) {
    %c0_i32 = arith.constant 0 : i32
    %c0_i32_0 = arith.constant 0 : i32
    return %arg0, %c0_i32 : i32, i32
  }
  func.func @transform_1(%arg0: i32) -> (i32, i32) {
    %c0_i32 = arith.constant 0 : i32
    %c0_i32_0 = arith.constant 0 : i32
    return %arg0, %c0_i32 : i32, i32
  }
  func.func @transform_2(%arg0: i32) -> (i32, i32) {
    %c0_i32 = arith.constant 0 : i32
    %c0_i32_0 = arith.constant 0 : i32
    %c0_i32_1 = arith.constant 0 : i32
    return %c0_i32, %c0_i32_0 : i32, i32
  }
  func.func @transform_3(%arg0: i32) -> (i32, i32) {
    %c0_i32 = arith.constant 0 : i32
    %c0_i32_0 = arith.constant 0 : i32
    %c0_i32_1 = arith.constant 0 : i32
    return %c0_i32, %c0_i32_0 : i32, i32
  }
  func.func @transform_4(%arg0: i32) -> (i32, i32) {
    %c0_i32 = arith.constant 0 : i32
    %c0_i32_0 = arith.constant 0 : i32
    %c0_i32_1 = arith.constant 0 : i32
    return %c0_i32, %c0_i32_0 : i32, i32
  }
  func.func @transform_5(%arg0: i32) -> (i32, i32) {
    %c0_i32 = arith.constant 0 : i32
    %c0_i32_0 = arith.constant 0 : i32
    return %arg0, %c0_i32 : i32, i32
  }
}

</mosaic_0001>

<llo_original>
// kernel: tpu_custom_call.1
$region0: #{tpu_custom_call.1}
  #allocation0 [shape = 'u32[]', space=smem, size = 0x4, offset = 0x4, fixed_abs, tag = 'smem constant byte address 0x4 - core index']
  #allocation1 [shape = 'u32[144,128]{1,0:T(1,128)}', space=vmem, size = 0x12000, scoped, tag = 'internal scratch']
  %s0 = inlined_call_operand.hbm [shape: f32[8,128], index: 0, kind: input, shape index: {}]
  %s1 = inlined_call_operand.hbm [shape: f32[8,128], index: 1, kind: input, shape index: {}]
  %s2 = inlined_call_operand.hbm [shape: f32[128,256], index: 2, kind: input, shape index: {}]
  %s3 = inlined_call_operand.hbm [shape: f32[128,256], index: 3, kind: input, shape index: {}]
  %s4 = inlined_call_operand.vmem [shape: f32[1,256], index: 4, kind: input, shape index: {}]
  %s5 = inlined_call_operand.hbm [shape: f32[8,128], index: 5, kind: output, shape index: {}]
  %s6 = sld [smem:[#allocation0]]
  $region46: #{tpu_custom_call.1} parent=0
    _
  %s8 = ssub.s32 1, %s6
  %s9 = scalar_select 0, %s8, %s6
  $region1: #{tpu_custom_call.1} parent=0
    #allocation2 [shape = 'u8[4096]{0}', space=vmem, size = 0x1000, scoped, tag = 'input window, operand 0, single buffered']
    #allocation3 [shape = 's32[1]{0}', space=sflag, size = 0x4, scoped, tag = 'scoped memory for tpu_custom_call.1']
    #allocation4 [shape = 's32[1]{0}', space=sflag, size = 0x4, scoped, tag = 'scoped memory for tpu_custom_call.1']
    #allocation5 [shape = 'u8[4096]{0}', space=vmem, size = 0x1000, scoped, tag = 'input window, operand 1, single buffered']
    #allocation6 [shape = 's32[1]{0}', space=sflag, size = 0x4, scoped, tag = 'scoped memory for tpu_custom_call.1']
    #allocation7 [shape = 'u8[131072]{0}', space=vmem, size = 0x20000, scoped, tag = 'input window, operand 2, single buffered']
    #allocation8 [shape = 'u8[131072]{0}', space=vmem, size = 0x20000, scoped, tag = 'input window, operand 3, single buffered']
    #allocation9 [shape = 's32[1]{0}', space=sflag, size = 0x4, scoped, tag = 'scoped memory for tpu_custom_call.1']
    #allocation10 [shape = 'u8[4096]{0}', space=vmem, size = 0x1000, scoped, tag = 'output window, operand 0, single buffered']
    %10 = vsyncpa [#allocation3], 0
    %11 = vsyncpa [#allocation6], 0
    %12 = vsyncpa [#allocation9], 0
    %13 = vsyncpa [#allocation4], 0
    // Predicated region
    $region2: #{tpu_custom_call.1} parent=1 // pred_check
      _
    $region3: #{tpu_custom_call.1} parent=1 // pred_check_branch
      %15 = sbr.rel (0) target = $region5
    $region4: #{tpu_custom_call.1} parent=1 // pred_region
      %s17 = ssub.s32 128, 128
      %18 = vsyncadd [#allocation3], %s17
      %s20 = sshll.u32 [#allocation2], 4
      %s21 = int_to_ptr.vmem [resolvable:$true] %s20
      %23 = dma.hbm_to_vmem [thread:$0]  %s0, 128, %s21, [#allocation3]
    $region5: #{tpu_custom_call.1} parent=1 // pred_fallthru
      _
    // Predicated region
    $region6: #{tpu_custom_call.1} parent=1 // pred_check
      _
    $region7: #{tpu_custom_call.1} parent=1 // pred_check_branch
      %25 = sbr.rel (0) target = $region9
    $region8: #{tpu_custom_call.1} parent=1 // pred_region
      %s27 = ssub.s32 128, 128
      %28 = vsyncadd [#allocation6], %s27
      %s30 = sshll.u32 [#allocation5], 4
      %s31 = int_to_ptr.vmem [resolvable:$true] %s30
      %33 = dma.hbm_to_vmem [thread:$0]  %s1, 128, %s31, [#allocation6]
    $region9: #{tpu_custom_call.1} parent=1 // pred_fallthru
      _
    // Predicated region
    $region10: #{tpu_custom_call.1} parent=1 // pred_check
      _
    $region11: #{tpu_custom_call.1} parent=1 // pred_check_branch
      %35 = sbr.rel (0) target = $region13
    $region12: #{tpu_custom_call.1} parent=1 // pred_region
      %s37 = ssub.s32 4096, 4096
      %38 = vsyncadd [#allocation6], %s37
      %s39 = sshll.u32 [#allocation7], 4
      %s40 = int_to_ptr.vmem [resolvable:$true] %s39
      %45 = dma.hbm_to_vmem [thread:$0]  %s2, 4096, %s40, [#allocation6], 256, 256, 16
    $region13: #{tpu_custom_call.1} parent=1 // pred_fallthru
      _
    // Predicated region
    $region14: #{tpu_custom_call.1} parent=1 // pred_check
      _
    $region15: #{tpu_custom_call.1} parent=1 // pred_check_branch
      %47 = sbr.rel (0) target = $region17
    $region16: #{tpu_custom_call.1} parent=1 // pred_region
      %s49 = ssub.s32 4096, 4096
      %50 = vsyncadd [#allocation9], %s49
      %s51 = sshll.u32 [#allocation8], 4
      %s52 = int_to_ptr.vmem [resolvable:$true] %s51
      %57 = dma.hbm_to_vmem [thread:$0]  %s3, 4096, %s52, [#allocation9], 256, 256, 16
    $region17: #{tpu_custom_call.1} parent=1 // pred_fallthru
      _
    // Predicated region
    $region18: #{tpu_custom_call.1} parent=1 // pred_check
      _
    $region19: #{tpu_custom_call.1} parent=1 // pred_check_branch
      %59 = sbr.rel (0) target = $region21
    $region20: #{tpu_custom_call.1} parent=1 // pred_region
      _
    $region21: #{tpu_custom_call.1} parent=1 // pred_fallthru
      _
    // Predicated region
    $region22: #{tpu_custom_call.1} parent=1 // pred_check
      _
    $region23: #{tpu_custom_call.1} parent=1 // pred_check_branch
      %61 = sbr.rel (0) target = $region25
    $region24: #{tpu_custom_call.1} parent=1 // pred_region
      %62 = dma.done [#allocation3], 128
    $region25: #{tpu_custom_call.1} parent=1 // pred_fallthru
      _
    // Predicated region
    $region26: #{tpu_custom_call.1} parent=1 // pred_check
      _
    $region27: #{tpu_custom_call.1} parent=1 // pred_check_branch
      %64 = sbr.rel (0) target = $region29
    $region28: #{tpu_custom_call.1} parent=1 // pred_region
      %65 = dma.done [#allocation6], 128
    $region29: #{tpu_custom_call.1} parent=1 // pred_fallthru
      _
    // Predicated region
    $region30: #{tpu_custom_call.1} parent=1 // pred_check
      _
    $region31: #{tpu_custom_call.1} parent=1 // pred_check_branch
      %67 = sbr.rel (0) target = $region33
    $region32: #{tpu_custom_call.1} parent=1 // pred_region
      %68 = dma.done [#allocation6], 4096
    $region33: #{tpu_custom_call.1} parent=1 // pred_fallthru
      _
    // Predicated region
    $region34: #{tpu_custom_call.1} parent=1 // pred_check
      _
    $region35: #{tpu_custom_call.1} parent=1 // pred_check_branch
      %70 = sbr.rel (0) target = $region37
    $region36: #{tpu_custom_call.1} parent=1 // pred_region
      %71 = dma.done [#allocation9], 4096
    $region37: #{tpu_custom_call.1} parent=1 // pred_fallthru
      _
    %v72 = vld [vmem:[#allocation2] sm:$0xff]
    %v73 = vld [vmem:[#allocation5] sm:$0xff]
    %v74 = vld [vmem:[#allocation7] sm:$0xff]
    %v75 = vld [vmem:[#allocation7 + $0x8] sm:$0xff]
    %v76 = vld [vmem:[#allocation7 + $0x10] sm:$0xff]
    %v77 = vld [vmem:[#allocation7 + $0x18] sm:$0xff]
    %v78 = vld [vmem:[#allocation7 + $0x20] sm:$0xff]
    %v79 = vld [vmem:[#allocation7 + $0x28] sm:$0xff]
    %v80 = vld [vmem:[#allocation7 + $0x30] sm:$0xff]
    %v81 = vld [vmem:[#allocation7 + $0x38] sm:$0xff]
    %v82 = vld [vmem:[#allocation7 + $0x40] sm:$0xff]
    %v83 = vld [vmem:[#allocation7 + $0x48] sm:$0xff]
    %v84 = vld [vmem:[#allocation7 + $0x50] sm:$0xff]
    %v85 = vld [vmem:[#allocation7 + $0x58] sm:$0xff]
    %v86 = vld [vmem:[#allocation7 + $0x60] sm:$0xff]
    %v87 = vld [vmem:[#allocation7 + $0x68] sm:$0xff]
    %v88 = vld [vmem:[#allocation7 + $0x70] sm:$0xff]
    %v89 = vld [vmem:[#allocation7 + $0x78] sm:$0xff]
    %v90 = vld [vmem:[#allocation7 + $0x80] sm:$0xff]
    %v91 = vld [vmem:[#allocation7 + $0x88] sm:$0xff]
    %v92 = vld [vmem:[#allocation7 + $0x90] sm:$0xff]
    %v93 = vld [vmem:[#allocation7 + $0x98] sm:$0xff]
    %v94 = vld [vmem:[#allocation7 + $0xa0] sm:$0xff]
    %v95 = vld [vmem:[#allocation7 + $0xa8] sm:$0xff]
    %v96 = vld [vmem:[#allocation7 + $0xb0] sm:$0xff]
    %v97 = vld [vmem:[#allocation7 + $0xb8] sm:$0xff]
    %v98 = vld [vmem:[#allocation7 + $0xc0] sm:$0xff]
    %v99 = vld [vmem:[#allocation7 + $0xc8] sm:$0xff]
    %v100 = vld [vmem:[#allocation7 + $0xd0] sm:$0xff]
    %v101 = vld [vmem:[#allocation7 + $0xd8] sm:$0xff]
    %v102 = vld [vmem:[#allocation7 + $0xe0] sm:$0xff]
    %v103 = vld [vmem:[#allocation7 + $0xe8] sm:$0xff]
    %v104 = vld [vmem:[#allocation7 + $0xf0] sm:$0xff]
    %v105 = vld [vmem:[#allocation7 + $0xf8] sm:$0xff]
    %v106 = vld [vmem:[#allocation8] sm:$0xff]
    %v107 = vld [vmem:[#allocation8 + $0x8] sm:$0xff]
    %v108 = vld [vmem:[#allocation8 + $0x10] sm:$0xff]
    %v109 = vld [vmem:[#allocation8 + $0x18] sm:$0xff]
    %v110 = vld [vmem:[#allocation8 + $0x20] sm:$0xff]
    %v111 = vld [vmem:[#allocation8 + $0x28] sm:$0xff]
    %v112 = vld [vmem:[#allocation8 + $0x30] sm:$0xff]
    %v113 = vld [vmem:[#allocation8 + $0x38] sm:$0xff]
    %v114 = vld [vmem:[#allocation8 + $0x40] sm:$0xff]
    %v115 = vld [vmem:[#allocation8 + $0x48] sm:$0xff]
    %v116 = vld [vmem:[#allocation8 + $0x50] sm:$0xff]
    %v117 = vld [vmem:[#allocation8 + $0x58] sm:$0xff]
    %v118 = vld [vmem:[#allocation8 + $0x60] sm:$0xff]
    %v119 = vld [vmem:[#allocation8 + $0x68] sm:$0xff]
    %v120 = vld [vmem:[#allocation8 + $0x70] sm:$0xff]
    %v121 = vld [vmem:[#allocation8 + $0x78] sm:$0xff]
    %v122 = vld [vmem:[#allocation8 + $0x80] sm:$0xff]
    %v123 = vld [vmem:[#allocation8 + $0x88] sm:$0xff]
    %v124 = vld [vmem:[#allocation8 + $0x90] sm:$0xff]
    %v125 = vld [vmem:[#allocation8 + $0x98] sm:$0xff]
    %v126 = vld [vmem:[#allocation8 + $0xa0] sm:$0xff]
    %v127 = vld [vmem:[#allocation8 + $0xa8] sm:$0xff]
    %v128 = vld [vmem:[#allocation8 + $0xb0] sm:$0xff]
    %v129 = vld [vmem:[#allocation8 + $0xb8] sm:$0xff]
    %v130 = vld [vmem:[#allocation8 + $0xc0] sm:$0xff]
    %v131 = vld [vmem:[#allocation8 + $0xc8] sm:$0xff]
    %v132 = vld [vmem:[#allocation8 + $0xd0] sm:$0xff]
    %v133 = vld [vmem:[#allocation8 + $0xd8] sm:$0xff]
    %v134 = vld [vmem:[#allocation8 + $0xe0] sm:$0xff]
    %v135 = vld [vmem:[#allocation8 + $0xe8] sm:$0xff]
    %v136 = vld [vmem:[#allocation8 + $0xf0] sm:$0xff]
    %v137 = vld [vmem:[#allocation8 + $0xf8] sm:$0xff]
    %v138 = vand.u32 %v107, 4294901760
    %139 = vmatprep.subr.mxu0 %v138
    %v140 = vand.u32 %v106, 4294901760
    %141 = vmatpush1.msra.mxu0 %v140
    %v142 = vand.u32 %v109, 4294901760
    %143 = vmatprep.subr.mxu0 %v142
    %v144 = vand.u32 %v108, 4294901760
    %145 = vmatpush1.msra.mxu0 %v144
    %v146 = vand.u32 %v111, 4294901760
    %147 = vmatprep.subr.mxu0 %v146
    %v148 = vand.u32 %v110, 4294901760
    %149 = vmatpush1.msra.mxu0 %v148
    %v150 = vand.u32 %v113, 4294901760
    %151 = vmatprep.subr.mxu0 %v150
    %v152 = vand.u32 %v112, 4294901760
    %153 = vmatpush1.msra.mxu0 %v152
    %v154 = vand.u32 %v115, 4294901760
    %155 = vmatprep.subr.mxu0 %v154
    %v156 = vand.u32 %v114, 4294901760
    %157 = vmatpush1.msra.mxu0 %v156
    %v158 = vand.u32 %v117, 4294901760
    %159 = vmatprep.subr.mxu0 %v158
    %v160 = vand.u32 %v116, 4294901760
    %161 = vmatpush1.msra.mxu0 %v160
    %v162 = vand.u32 %v119, 4294901760
    %163 = vmatprep.subr.mxu0 %v162
    %v164 = vand.u32 %v118, 4294901760
    %165 = vmatpush1.msra.mxu0 %v164
    %v166 = vand.u32 %v121, 4294901760
    %167 = vmatprep.subr.mxu0 %v166
    %v168 = vand.u32 %v120, 4294901760
    %169 = vmatpush1.msra.mxu0 %v168
    %v170 = vand.u32 %v123, 4294901760
    %171 = vmatprep.subr.mxu0 %v170
    %v172 = vand.u32 %v122, 4294901760
    %173 = vmatpush1.msra.mxu0 %v172
    %v174 = vand.u32 %v125, 4294901760
    %175 = vmatprep.subr.mxu0 %v174
    %v176 = vand.u32 %v124, 4294901760
    %177 = vmatpush1.msra.mxu0 %v176
    %v178 = vand.u32 %v127, 4294901760
    %179 = vmatprep.subr.mxu0 %v178
    %v180 = vand.u32 %v126, 4294901760
    %181 = vmatpush1.msra.mxu0 %v180
    %v182 = vand.u32 %v129, 4294901760
    %183 = vmatprep.subr.mxu0 %v182
    %v184 = vand.u32 %v128, 4294901760
    %185 = vmatpush1.msra.mxu0 %v184
    %v186 = vand.u32 %v131, 4294901760
    %187 = vmatprep.subr.mxu0 %v186
    %v188 = vand.u32 %v130, 4294901760
    %189 = vmatpush1.msra.mxu0 %v188
    %v190 = vand.u32 %v133, 4294901760
    %191 = vmatprep.subr.mxu0 %v190
    %v192 = vand.u32 %v132, 4294901760
    %193 = vmatpush1.msra.mxu0 %v192
    %v194 = vand.u32 %v135, 4294901760
    %195 = vmatprep.subr.mxu0 %v194
    %v196 = vand.u32 %v134, 4294901760
    %197 = vmatpush1.msra.mxu0 %v196
    %v198 = vand.u32 %v137, 4294901760
    %199 = vmatprep.subr.mxu0 %v198
    %v200 = vand.u32 %v136, 4294901760
    %201 = vmatpush1.msra.mxu0 %v200
    %202 = vmatprep.subr.mxu0 0.0
    %203 = vmatpush1.msra.mxu0 0.0
    %204 = vmatprep.subr.mxu0 0.0
    %205 = vmatpush1.msra.mxu0 0.0
    %206 = vmatprep.subr.mxu0 0.0
    %207 = vmatpush1.msra.mxu0 0.0
    %208 = vmatprep.subr.mxu0 0.0
    %209 = vmatpush1.msra.mxu0 0.0
    %210 = vmatprep.subr.mxu0 0.0
    %211 = vmatpush1.msra.mxu0 0.0
    %212 = vmatprep.subr.mxu0 0.0
    %213 = vmatpush1.msra.mxu0 0.0
    %214 = vmatprep.subr.mxu0 0.0
    %215 = vmatpush1.msra.mxu0 0.0
    %216 = vmatprep.subr.mxu0 0.0
    %217 = vmatpush1.msra.mxu0 0.0
    %218 = vmatprep.subr.mxu0 0.0
    %219 = vmatpush1.msra.mxu0 0.0
    %220 = vmatprep.subr.mxu0 0.0
    %221 = vmatpush1.msra.mxu0 0.0
    %222 = vmatprep.subr.mxu0 0.0
    %223 = vmatpush1.msra.mxu0 0.0
    %224 = vmatprep.subr.mxu0 0.0
    %225 = vmatpush1.msra.mxu0 0.0
    %226 = vmatprep.subr.mxu0 0.0
    %227 = vmatpush1.msra.mxu0 0.0
    %228 = vmatprep.subr.mxu0 0.0
    %229 = vmatpush1.msra.mxu0 0.0
    %230 = vmatprep.subr.mxu0 0.0
    %231 = vmatpush1.msra.mxu0 0.0
    %232 = vmatprep.subr.mxu0 0.0
    %233 = vmatpush1.msra.mxu0 0.0
    %234 = vmatprep.mubr.f32.mxu0 0.0
    %v235 = vand.u32 %v73, 4294901760
    %v236 = vsub.f32 %v73, %v235
    %v237 = vand.u32 %v236, 4294901760
    %v238 = vsub.f32 %v236, %v237
    %v239 = vand.u32 %v238, 4294901760
    %240 = vmatmul.mubr.f32.gmra.mrb[0].mxu0 %v239
    %v241 = vpop.f32.mrb[0].mxu0
    %v242 = vadd.f32 0.0, %v241
    %v243 = vpop.f32.mrb[0].mxu0
    %v244 = vadd.f32 0.0, %v243
    %245 = vdwg.mxu0
    %v246 = vand.u32 %v107, 4294901760
    %v247 = vsub.f32 %v107, %v246
    %v248 = vand.u32 %v247, 4294901760
    %v249 = vsub.f32 %v247, %v248
    %v250 = vand.u32 %v249, 4294901760
    %251 = vmatprep.subr.mxu0 %v250
    %v252 = vand.u32 %v106, 4294901760
    %v253 = vsub.f32 %v106, %v252
    %v254 = vand.u32 %v253, 4294901760
    %v255 = vsub.f32 %v253, %v254
    %v256 = vand.u32 %v255, 4294901760
    %257 = vmatpush1.msra.mxu0 %v256
    %v258 = vand.u32 %v109, 4294901760
    %v259 = vsub.f32 %v109, %v258
    %v260 = vand.u32 %v259, 4294901760
    %v261 = vsub.f32 %v259, %v260
    %v262 = vand.u32 %v261, 4294901760
    %263 = vmatprep.subr.mxu0 %v262
    %v264 = vand.u32 %v108, 4294901760
    %v265 = vsub.f32 %v108, %v264
    %v266 = vand.u32 %v265, 4294901760
    %v267 = vsub.f32 %v265, %v266
    %v268 = vand.u32 %v267, 4294901760
    %269 = vmatpush1.msra.mxu0 %v268
    %v270 = vand.u32 %v111, 4294901760
    %v271 = vsub.f32 %v111, %v270
    %v272 = vand.u32 %v271, 4294901760
    %v273 = vsub.f32 %v271, %v272
    %v274 = vand.u32 %v273, 4294901760
    %275 = vmatprep.subr.mxu0 %v274
    %v276 = vand.u32 %v110, 4294901760
    %v277 = vsub.f32 %v110, %v276
    %v278 = vand.u32 %v277, 4294901760
    %v279 = vsub.f32 %v277, %v278
    %v280 = vand.u32 %v279, 4294901760
    %281 = vmatpush1.msra.mxu0 %v280
    %v282 = vand.u32 %v113, 4294901760
    %v283 = vsub.f32 %v113, %v282
    %v284 = vand.u32 %v283, 4294901760
    %v285 = vsub.f32 %v283, %v284
    %v286 = vand.u32 %v285, 4294901760
    %287 = vmatprep.subr.mxu0 %v286
    %v288 = vand.u32 %v112, 4294901760
    %v289 = vsub.f32 %v112, %v288
    %v290 = vand.u32 %v289, 4294901760
    %v291 = vsub.f32 %v289, %v290
    %v292 = vand.u32 %v291, 4294901760
    %293 = vmatpush1.msra.mxu0 %v292
    %v294 = vand.u32 %v115, 4294901760
    %v295 = vsub.f32 %v115, %v294
    %v296 = vand.u32 %v295, 4294901760
    %v297 = vsub.f32 %v295, %v296
    %v298 = vand.u32 %v297, 4294901760
    %299 = vmatprep.subr.mxu0 %v298
    %v300 = vand.u32 %v114, 4294901760
    %v301 = vsub.f32 %v114, %v300
    %v302 = vand.u32 %v301, 4294901760
    %v303 = vsub.f32 %v301, %v302
    %v304 = vand.u32 %v303, 4294901760
    %305 = vmatpush1.msra.mxu0 %v304
    %v306 = vand.u32 %v117, 4294901760
    %v307 = vsub.f32 %v117, %v306
    %v308 = vand.u32 %v307, 4294901760
    %v309 = vsub.f32 %v307, %v308
    %v310 = vand.u32 %v309, 4294901760
    %311 = vmatprep.subr.mxu0 %v310
    %v312 = vand.u32 %v116, 4294901760
    %v313 = vsub.f32 %v116, %v312
    %v314 = vand.u32 %v313, 4294901760
    %v315 = vsub.f32 %v313, %v314
    %v316 = vand.u32 %v315, 4294901760
    %317 = vmatpush1.msra.mxu0 %v316
    %v318 = vand.u32 %v119, 4294901760
    %v319 = vsub.f32 %v119, %v318
    %v320 = vand.u32 %v319, 4294901760
    %v321 = vsub.f32 %v319, %v320
    %v322 = vand.u32 %v321, 4294901760
    %323 = vmatprep.subr.mxu0 %v322
    %v324 = vand.u32 %v118, 4294901760
    %v325 = vsub.f32 %v118, %v324
    %v326 = vand.u32 %v325, 4294901760
    %v327 = vsub.f32 %v325, %v326
    %v328 = vand.u32 %v327, 4294901760
    %329 = vmatpush1.msra.mxu0 %v328
    %v330 = vand.u32 %v121, 4294901760
    %v331 = vsub.f32 %v121, %v330
    %v332 = vand.u32 %v331, 4294901760
    %v333 = vsub.f32 %v331, %v332
    %v334 = vand.u32 %v333, 4294901760
    %335 = vmatprep.subr.mxu0 %v334
    %v336 = vand.u32 %v120, 4294901760
    %v337 = vsub.f32 %v120, %v336
    %v338 = vand.u32 %v337, 4294901760
    %v339 = vsub.f32 %v337, %v338
    %v340 = vand.u32 %v339, 4294901760
    %341 = vmatpush1.msra.mxu0 %v340
    %v342 = vand.u32 %v123, 4294901760
    %v343 = vsub.f32 %v123, %v342
    %v344 = vand.u32 %v343, 4294901760
    %v345 = vsub.f32 %v343, %v344
    %v346 = vand.u32 %v345, 4294901760
    %347 = vmatprep.subr.mxu0 %v346
    %v348 = vand.u32 %v122, 4294901760
    %v349 = vsub.f32 %v122, %v348
    %v350 = vand.u32 %v349, 4294901760
    %v351 = vsub.f32 %v349, %v350
    %v352 = vand.u32 %v351, 4294901760
    %353 = vmatpush1.msra.mxu0 %v352
    %v354 = vand.u32 %v125, 4294901760
    %v355 = vsub.f32 %v125, %v354
    %v356 = vand.u32 %v355, 4294901760
    %v357 = vsub.f32 %v355, %v356
    %v358 = vand.u32 %v357, 4294901760
    %359 = vmatprep.subr.mxu0 %v358
    %v360 = vand.u32 %v124, 4294901760
    %v361 = vsub.f32 %v124, %v360
    %v362 = vand.u32 %v361, 4294901760
    %v363 = vsub.f32 %v361, %v362
    %v364 = vand.u32 %v363, 4294901760
    %365 = vmatpush1.msra.mxu0 %v364
    %v366 = vand.u32 %v127, 4294901760
    %v367 = vsub.f32 %v127, %v366
    %v368 = vand.u32 %v367, 4294901760
    %v369 = vsub.f32 %v367, %v368
    %v370 = vand.u32 %v369, 4294901760
    %371 = vmatprep.subr.mxu0 %v370
    %v372 = vand.u32 %v126, 4294901760
    %v373 = vsub.f32 %v126, %v372
    %v374 = vand.u32 %v373, 4294901760
    %v375 = vsub.f32 %v373, %v374
    %v376 = vand.u32 %v375, 4294901760
    %377 = vmatpush1.msra.mxu0 %v376
    %v378 = vand.u32 %v129, 4294901760
    %v379 = vsub.f32 %v129, %v378
    %v380 = vand.u32 %v379, 4294901760
    %v381 = vsub.f32 %v379, %v380
    %v382 = vand.u32 %v381, 4294901760
    %383 = vmatprep.subr.mxu0 %v382
    %v384 = vand.u32 %v128, 4294901760
    %v385 = vsub.f32 %v128, %v384
    %v386 = vand.u32 %v385, 4294901760
    %v387 = vsub.f32 %v385, %v386
    %v388 = vand.u32 %v387, 4294901760
    %389 = vmatpush1.msra.mxu0 %v388
    %v390 = vand.u32 %v131, 4294901760
    %v391 = vsub.f32 %v131, %v390
    %v392 = vand.u32 %v391, 4294901760
    %v393 = vsub.f32 %v391, %v392
    %v394 = vand.u32 %v393, 4294901760
    %395 = vmatprep.subr.mxu0 %v394
    %v396 = vand.u32 %v130, 4294901760
    %v397 = vsub.f32 %v130, %v396
    %v398 = vand.u32 %v397, 4294901760
    %v399 = vsub.f32 %v397, %v398
    %v400 = vand.u32 %v399, 4294901760
    %401 = vmatpush1.msra.mxu0 %v400
    %v402 = vand.u32 %v133, 4294901760
    %v403 = vsub.f32 %v133, %v402
    %v404 = vand.u32 %v403, 4294901760
    %v405 = vsub.f32 %v403, %v404
    %v406 = vand.u32 %v405, 4294901760
    %407 = vmatprep.subr.mxu0 %v406
    %v408 = vand.u32 %v132, 4294901760
    %v409 = vsub.f32 %v132, %v408
    %v410 = vand.u32 %v409, 4294901760
    %v411 = vsub.f32 %v409, %v410
    %v412 = vand.u32 %v411, 4294901760
    %413 = vmatpush1.msra.mxu0 %v412
    %v414 = vand.u32 %v135, 4294901760
    %v415 = vsub.f32 %v135, %v414
    %v416 = vand.u32 %v415, 4294901760
    %v417 = vsub.f32 %v415, %v416
    %v418 = vand.u32 %v417, 4294901760
    %419 = vmatprep.subr.mxu0 %v418
    %v420 = vand.u32 %v134, 4294901760
    %v421 = vsub.f32 %v134, %v420
    %v422 = vand.u32 %v421, 4294901760
    %v423 = vsub.f32 %v421, %v422
    %v424 = vand.u32 %v423, 4294901760
    %425 = vmatpush1.msra.mxu0 %v424
    %v426 = vand.u32 %v137, 4294901760
    %v427 = vsub.f32 %v137, %v426
    %v428 = vand.u32 %v427, 4294901760
    %v429 = vsub.f32 %v427, %v428
    %v430 = vand.u32 %v429, 4294901760
    %431 = vmatprep.subr.mxu0 %v430
    %v432 = vand.u32 %v136, 4294901760
    %v433 = vsub.f32 %v136, %v432
    %v434 = vand.u32 %v433, 4294901760
    %v435 = vsub.f32 %v433, %v434
    %v436 = vand.u32 %v435, 4294901760
    %437 = vmatpush1.msra.mxu0 %v436
    %438 = vmatprep.subr.mxu0 0.0
    %439 = vmatpush1.msra.mxu0 0.0
    %440 = vmatprep.subr.mxu0 0.0
    %441 = vmatpush1.msra.mxu0 0.0
    %442 = vmatprep.subr.mxu0 0.0
    %443 = vmatpush1.msra.mxu0 0.0
    %444 = vmatprep.subr.mxu0 0.0
    %445 = vmatpush1.msra.mxu0 0.0
    %446 = vmatprep.subr.mxu0 0.0
    %447 = vmatpush1.msra.mxu0 0.0
    %448 = vmatprep.subr.mxu0 0.0
    %449 = vmatpush1.msra.mxu0 0.0
    %450 = vmatprep.subr.mxu0 0.0
    %451 = vmatpush1.msra.mxu0 0.0
    %452 = vmatprep.subr.mxu0 0.0
    %453 = vmatpush1.msra.mxu0 0.0
    %454 = vmatprep.subr.mxu0 0.0
    %455 = vmatpush1.msra.mxu0 0.0
    %456 = vmatprep.subr.mxu0 0.0
    %457 = vmatpush1.msra.mxu0 0.0
    %458 = vmatprep.subr.mxu0 0.0
    %459 = vmatpush1.msra.mxu0 0.0
    %460 = vmatprep.subr.mxu0 0.0
    %461 = vmatpush1.msra.mxu0 0.0
    %462 = vmatprep.subr.mxu0 0.0
    %463 = vmatpush1.msra.mxu0 0.0
    %464 = vmatprep.subr.mxu0 0.0
    %465 = vmatpush1.msra.mxu0 0.0
    %466 = vmatprep.subr.mxu0 0.0
    %467 = vmatpush1.msra.mxu0 0.0
    %468 = vmatprep.subr.mxu0 0.0
    %469 = vmatpush1.msra.mxu0 0.0
    %470 = vmatprep.mubr.f32.mxu0 0.0
    %v471 = vand.u32 %v73, 4294901760
    %472 = vmatmul.mubr.f32.gmra.mrb[0].mxu0 %v471
    %v473 = vpop.f32.mrb[0].mxu0
    %v474 = vadd.f32 %v242, %v473
    %v475 = vpop.f32.mrb[0].mxu0
    %v476 = vadd.f32 %v244, %v475
    %477 = vdwg.mxu0
    %v478 = vand.u32 %v107, 4294901760
    %v479 = vsub.f32 %v107, %v478
    %480 = vmatprep.subr.mxu0 %v479
    %v481 = vand.u32 %v106, 4294901760
    %v482 = vsub.f32 %v106, %v481
    %483 = vmatpush1.msra.mxu0 %v482
    %v484 = vand.u32 %v109, 4294901760
    %v485 = vsub.f32 %v109, %v484
    %486 = vmatprep.subr.mxu0 %v485
    %v487 = vand.u32 %v108, 4294901760
    %v488 = vsub.f32 %v108, %v487
    %489 = vmatpush1.msra.mxu0 %v488
    %v490 = vand.u32 %v111, 4294901760
    %v491 = vsub.f32 %v111, %v490
    %492 = vmatprep.subr.mxu0 %v491
    %v493 = vand.u32 %v110, 4294901760
    %v494 = vsub.f32 %v110, %v493
    %495 = vmatpush1.msra.mxu0 %v494
    %v496 = vand.u32 %v113, 4294901760
    %v497 = vsub.f32 %v113, %v496
    %498 = vmatprep.subr.mxu0 %v497
    %v499 = vand.u32 %v112, 4294901760
    %v500 = vsub.f32 %v112, %v499
    %501 = vmatpush1.msra.mxu0 %v500
    %v502 = vand.u32 %v115, 4294901760
    %v503 = vsub.f32 %v115, %v502
    %504 = vmatprep.subr.mxu0 %v503
    %v505 = vand.u32 %v114, 4294901760
    %v506 = vsub.f32 %v114, %v505
    %507 = vmatpush1.msra.mxu0 %v506
    %v508 = vand.u32 %v117, 4294901760
    %v509 = vsub.f32 %v117, %v508
    %510 = vmatprep.subr.mxu0 %v509
    %v511 = vand.u32 %v116, 4294901760
    %v512 = vsub.f32 %v116, %v511
    %513 = vmatpush1.msra.mxu0 %v512
    %v514 = vand.u32 %v119, 4294901760
    %v515 = vsub.f32 %v119, %v514
    %516 = vmatprep.subr.mxu0 %v515
    %v517 = vand.u32 %v118, 4294901760
    %v518 = vsub.f32 %v118, %v517
    %519 = vmatpush1.msra.mxu0 %v518
    %v520 = vand.u32 %v121, 4294901760
    %v521 = vsub.f32 %v121, %v520
    %522 = vmatprep.subr.mxu0 %v521
    %v523 = vand.u32 %v120, 4294901760
    %v524 = vsub.f32 %v120, %v523
    %525 = vmatpush1.msra.mxu0 %v524
    %v526 = vand.u32 %v123, 4294901760
    %v527 = vsub.f32 %v123, %v526
    %528 = vmatprep.subr.mxu0 %v527
    %v529 = vand.u32 %v122, 4294901760
    %v530 = vsub.f32 %v122, %v529
    %531 = vmatpush1.msra.mxu0 %v530
    %v532 = vand.u32 %v125, 4294901760
    %v533 = vsub.f32 %v125, %v532
    %534 = vmatprep.subr.mxu0 %v533
    %v535 = vand.u32 %v124, 4294901760
    %v536 = vsub.f32 %v124, %v535
    %537 = vmatpush1.msra.mxu0 %v536
    %v538 = vand.u32 %v127, 4294901760
    %v539 = vsub.f32 %v127, %v538
    %540 = vmatprep.subr.mxu0 %v539
    %v541 = vand.u32 %v126, 4294901760
    %v542 = vsub.f32 %v126, %v541
    %543 = vmatpush1.msra.mxu0 %v542
    %v544 = vand.u32 %v129, 4294901760
    %v545 = vsub.f32 %v129, %v544
    %546 = vmatprep.subr.mxu0 %v545
    %v547 = vand.u32 %v128, 4294901760
    %v548 = vsub.f32 %v128, %v547
    %549 = vmatpush1.msra.mxu0 %v548
    %v550 = vand.u32 %v131, 4294901760
    %v551 = vsub.f32 %v131, %v550
    %552 = vmatprep.subr.mxu0 %v551
    %v553 = vand.u32 %v130, 4294901760
    %v554 = vsub.f32 %v130, %v553
    %555 = vmatpush1.msra.mxu0 %v554
    %v556 = vand.u32 %v133, 4294901760
    %v557 = vsub.f32 %v133, %v556
    %558 = vmatprep.subr.mxu0 %v557
    %v559 = vand.u32 %v132, 4294901760
    %v560 = vsub.f32 %v132, %v559
    %561 = vmatpush1.msra.mxu0 %v560
    %v562 = vand.u32 %v135, 4294901760
    %v563 = vsub.f32 %v135, %v562
    %564 = vmatprep.subr.mxu0 %v563
    %v565 = vand.u32 %v134, 4294901760
    %v566 = vsub.f32 %v134, %v565
    %567 = vmatpush1.msra.mxu0 %v566
    %v568 = vand.u32 %v137, 4294901760
    %v569 = vsub.f32 %v137, %v568
    %570 = vmatprep.subr.mxu0 %v569
    %v571 = vand.u32 %v136, 4294901760
    %v572 = vsub.f32 %v136, %v571
    %573 = vmatpush1.msra.mxu0 %v572
    %574 = vmatprep.subr.mxu0 0.0
    %575 = vmatpush1.msra.mxu0 0.0
    %576 = vmatprep.subr.mxu0 0.0
    %577 = vmatpush1.msra.mxu0 0.0
    %578 = vmatprep.subr.mxu0 0.0
    %579 = vmatpush1.msra.mxu0 0.0
    %580 = vmatprep.subr.mxu0 0.0
    %581 = vmatpush1.msra.mxu0 0.0
    %582 = vmatprep.subr.mxu0 0.0
    %583 = vmatpush1.msra.mxu0 0.0
    %584 = vmatprep.subr.mxu0 0.0
    %585 = vmatpush1.msra.mxu0 0.0
    %586 = vmatprep.subr.mxu0 0.0
    %587 = vmatpush1.msra.mxu0 0.0
    %588 = vmatprep.subr.mxu0 0.0
    %589 = vmatpush1.msra.mxu0 0.0
    %590 = vmatprep.subr.mxu0 0.0
    %591 = vmatpush1.msra.mxu0 0.0
    %592 = vmatprep.subr.mxu0 0.0
    %593 = vmatpush1.msra.mxu0 0.0
    %594 = vmatprep.subr.mxu0 0.0
    %595 = vmatpush1.msra.mxu0 0.0
    %596 = vmatprep.subr.mxu0 0.0
    %597 = vmatpush1.msra.mxu0 0.0
    %598 = vmatprep.subr.mxu0 0.0
    %599 = vmatpush1.msra.mxu0 0.0
    %600 = vmatprep.subr.mxu0 0.0
    %601 = vmatpush1.msra.mxu0 0.0
    %602 = vmatprep.subr.mxu0 0.0
    %603 = vmatpush1.msra.mxu0 0.0
    %604 = vmatprep.subr.mxu0 0.0
    %605 = vmatpush1.msra.mxu0 0.0
    %606 = vmatprep.mubr.f32.mxu0 0.0
    %v607 = vand.u32 %v73, 4294901760
    %v608 = vsub.f32 %v73, %v607
    %609 = vmatmul.mubr.f32.gmra.mrb[0].mxu0 %v608
    %v610 = vpop.f32.mrb[0].mxu0
    %v611 = vadd.f32 %v474, %v610
    %v612 = vpop.f32.mrb[0].mxu0
    %v613 = vadd.f32 %v476, %v612
    %614 = vdwg.mxu0
    %v615 = vand.u32 %v107, 4294901760
    %616 = vmatprep.subr.mxu0 %v615
    %v617 = vand.u32 %v106, 4294901760
    %618 = vmatpush1.msra.mxu0 %v617
    %v619 = vand.u32 %v109, 4294901760
    %620 = vmatprep.subr.mxu0 %v619
    %v621 = vand.u32 %v108, 4294901760
    %622 = vmatpush1.msra.mxu0 %v621
    %v623 = vand.u32 %v111, 4294901760
    %624 = vmatprep.subr.mxu0 %v623
    %v625 = vand.u32 %v110, 4294901760
    %626 = vmatpush1.msra.mxu0 %v625
    %v627 = vand.u32 %v113, 4294901760
    %628 = vmatprep.subr.mxu0 %v627
    %v629 = vand.u32 %v112, 4294901760
    %630 = vmatpush1.msra.mxu0 %v629
    %v631 = vand.u32 %v115, 4294901760
    %632 = vmatprep.subr.mxu0 %v631
    %v633 = vand.u32 %v114, 4294901760
    %634 = vmatpush1.msra.mxu0 %v633
    %v635 = vand.u32 %v117, 4294901760
    %636 = vmatprep.subr.mxu0 %v635
    %v637 = vand.u32 %v116, 4294901760
    %638 = vmatpush1.msra.mxu0 %v637
    %v639 = vand.u32 %v119, 4294901760
    %640 = vmatprep.subr.mxu0 %v639
    %v641 = vand.u32 %v118, 4294901760
    %642 = vmatpush1.msra.mxu0 %v641
    %v643 = vand.u32 %v121, 4294901760
    %644 = vmatprep.subr.mxu0 %v643
    %v645 = vand.u32 %v120, 4294901760
    %646 = vmatpush1.msra.mxu0 %v645
    %v647 = vand.u32 %v123, 4294901760
    %648 = vmatprep.subr.mxu0 %v647
    %v649 = vand.u32 %v122, 4294901760
    %650 = vmatpush1.msra.mxu0 %v649
    %v651 = vand.u32 %v125, 4294901760
    %652 = vmatprep.subr.mxu0 %v651
    %v653 = vand.u32 %v124, 4294901760
    %654 = vmatpush1.msra.mxu0 %v653
    %v655 = vand.u32 %v127, 4294901760
    %656 = vmatprep.subr.mxu0 %v655
    %v657 = vand.u32 %v126, 4294901760
    %658 = vmatpush1.msra.mxu0 %v657
    %v659 = vand.u32 %v129, 4294901760
    %660 = vmatprep.subr.mxu0 %v659
    %v661 = vand.u32 %v128, 4294901760
    %662 = vmatpush1.msra.mxu0 %v661
    %v663 = vand.u32 %v131, 4294901760
    %664 = vmatprep.subr.mxu0 %v663
    %v665 = vand.u32 %v130, 4294901760
    %666 = vmatpush1.msra.mxu0 %v665
    %v667 = vand.u32 %v133, 4294901760
    %668 = vmatprep.subr.mxu0 %v667
    %v669 = vand.u32 %v132, 4294901760
    %670 = vmatpush1.msra.mxu0 %v669
    %v671 = vand.u32 %v135, 4294901760
    %672 = vmatprep.subr.mxu0 %v671
    %v673 = vand.u32 %v134, 4294901760
    %674 = vmatpush1.msra.mxu0 %v673
    %v675 = vand.u32 %v137, 4294901760
    %676 = vmatprep.subr.mxu0 %v675
    %v677 = vand.u32 %v136, 4294901760
    %678 = vmatpush1.msra.mxu0 %v677
    %679 = vmatprep.subr.mxu0 0.0
    %680 = vmatpush1.msra.mxu0 0.0
    %681 = vmatprep.subr.mxu0 0.0
    %682 = vmatpush1.msra.mxu0 0.0
    %683 = vmatprep.subr.mxu0 0.0
    %684 = vmatpush1.msra.mxu0 0.0
    %685 = vmatprep.subr.mxu0 0.0
    %686 = vmatpush1.msra.mxu0 0.0
    %687 = vmatprep.subr.mxu0 0.0
    %688 = vmatpush1.msra.mxu0 0.0
    %689 = vmatprep.subr.mxu0 0.0
    %690 = vmatpush1.msra.mxu0 0.0
    %691 = vmatprep.subr.mxu0 0.0
    %692 = vmatpush1.msra.mxu0 0.0
    %693 = vmatprep.subr.mxu0 0.0
    %694 = vmatpush1.msra.mxu0 0.0
    %695 = vmatprep.subr.mxu0 0.0
    %696 = vmatpush1.msra.mxu0 0.0
    %697 = vmatprep.subr.mxu0 0.0
    %698 = vmatpush1.msra.mxu0 0.0
    %699 = vmatprep.subr.mxu0 0.0
    %700 = vmatpush1.msra.mxu0 0.0
    %701 = vmatprep.subr.mxu0 0.0
    %702 = vmatpush1.msra.mxu0 0.0
    %703 = vmatprep.subr.mxu0 0.0
    %704 = vmatpush1.msra.mxu0 0.0
    %705 = vmatprep.subr.mxu0 0.0
    %706 = vmatpush1.msra.mxu0 0.0
    %707 = vmatprep.subr.mxu0 0.0
    %708 = vmatpush1.msra.mxu0 0.0
    %709 = vmatprep.subr.mxu0 0.0
    %710 = vmatpush1.msra.mxu0 0.0
    %711 = vmatprep.mubr.f32.mxu0 0.0
    %v712 = vand.u32 %v73, 4294901760
    %v713 = vsub.f32 %v73, %v712
    %v714 = vand.u32 %v713, 4294901760
    %715 = vmatmul.mubr.f32.gmra.mrb[0].mxu0 %v714
    %v716 = vpop.f32.mrb[0].mxu0
    %v717 = vadd.f32 %v611, %v716
    %v718 = vpop.f32.mrb[0].mxu0
    %v719 = vadd.f32 %v613, %v718
    %720 = vdwg.mxu0
    %v721 = vand.u32 %v107, 4294901760
    %v722 = vsub.f32 %v107, %v721
    %v723 = vand.u32 %v722, 4294901760
    %724 = vmatprep.subr.mxu0 %v723
    %v725 = vand.u32 %v106, 4294901760
    %v726 = vsub.f32 %v106, %v725
    %v727 = vand.u32 %v726, 4294901760
    %728 = vmatpush1.msra.mxu0 %v727
    %v729 = vand.u32 %v109, 4294901760
    %v730 = vsub.f32 %v109, %v729
    %v731 = vand.u32 %v730, 4294901760
    %732 = vmatprep.subr.mxu0 %v731
    %v733 = vand.u32 %v108, 4294901760
    %v734 = vsub.f32 %v108, %v733
    %v735 = vand.u32 %v734, 4294901760
    %736 = vmatpush1.msra.mxu0 %v735
    %v737 = vand.u32 %v111, 4294901760
    %v738 = vsub.f32 %v111, %v737
    %v739 = vand.u32 %v738, 4294901760
    %740 = vmatprep.subr.mxu0 %v739
    %v741 = vand.u32 %v110, 4294901760
    %v742 = vsub.f32 %v110, %v741
    %v743 = vand.u32 %v742, 4294901760
    %744 = vmatpush1.msra.mxu0 %v743
    %v745 = vand.u32 %v113, 4294901760
    %v746 = vsub.f32 %v113, %v745
    %v747 = vand.u32 %v746, 4294901760
    %748 = vmatprep.subr.mxu0 %v747
    %v749 = vand.u32 %v112, 4294901760
    %v750 = vsub.f32 %v112, %v749
    %v751 = vand.u32 %v750, 4294901760
    %752 = vmatpush1.msra.mxu0 %v751
    %v753 = vand.u32 %v115, 4294901760
    %v754 = vsub.f32 %v115, %v753
    %v755 = vand.u32 %v754, 4294901760
    %756 = vmatprep.subr.mxu0 %v755
    %v757 = vand.u32 %v114, 4294901760
    %v758 = vsub.f32 %v114, %v757
    %v759 = vand.u32 %v758, 4294901760
    %760 = vmatpush1.msra.mxu0 %v759
    %v761 = vand.u32 %v117, 4294901760
    %v762 = vsub.f32 %v117, %v761
    %v763 = vand.u32 %v762, 4294901760
    %764 = vmatprep.subr.mxu0 %v763
    %v765 = vand.u32 %v116, 4294901760
    %v766 = vsub.f32 %v116, %v765
    %v767 = vand.u32 %v766, 4294901760
    %768 = vmatpush1.msra.mxu0 %v767
    %v769 = vand.u32 %v119, 4294901760
    %v770 = vsub.f32 %v119, %v769
    %v771 = vand.u32 %v770, 4294901760
    %772 = vmatprep.subr.mxu0 %v771
    %v773 = vand.u32 %v118, 4294901760
    %v774 = vsub.f32 %v118, %v773
    %v775 = vand.u32 %v774, 4294901760
    %776 = vmatpush1.msra.mxu0 %v775
    %v777 = vand.u32 %v121, 4294901760
    %v778 = vsub.f32 %v121, %v777
    %v779 = vand.u32 %v778, 4294901760
    %780 = vmatprep.subr.mxu0 %v779
    %v781 = vand.u32 %v120, 4294901760
    %v782 = vsub.f32 %v120, %v781
    %v783 = vand.u32 %v782, 4294901760
    %784 = vmatpush1.msra.mxu0 %v783
    %v785 = vand.u32 %v123, 4294901760
    %v786 = vsub.f32 %v123, %v785
    %v787 = vand.u32 %v786, 4294901760
    %788 = vmatprep.subr.mxu0 %v787
    %v789 = vand.u32 %v122, 4294901760
    %v790 = vsub.f32 %v122, %v789
    %v791 = vand.u32 %v790, 4294901760
    %792 = vmatpush1.msra.mxu0 %v791
    %v793 = vand.u32 %v125, 4294901760
    %v794 = vsub.f32 %v125, %v793
    %v795 = vand.u32 %v794, 4294901760
    %796 = vmatprep.subr.mxu0 %v795
    %v797 = vand.u32 %v124, 4294901760
    %v798 = vsub.f32 %v124, %v797
    %v799 = vand.u32 %v798, 4294901760
    %800 = vmatpush1.msra.mxu0 %v799
    %v801 = vand.u32 %v127, 4294901760
    %v802 = vsub.f32 %v127, %v801
    %v803 = vand.u32 %v802, 4294901760
    %804 = vmatprep.subr.mxu0 %v803
    %v805 = vand.u32 %v126, 4294901760
    %v806 = vsub.f32 %v126, %v805
    %v807 = vand.u32 %v806, 4294901760
    %808 = vmatpush1.msra.mxu0 %v807
    %v809 = vand.u32 %v129, 4294901760
    %v810 = vsub.f32 %v129, %v809
    %v811 = vand.u32 %v810, 4294901760
    %812 = vmatprep.subr.mxu0 %v811
    %v813 = vand.u32 %v128, 4294901760
    %v814 = vsub.f32 %v128, %v813
    %v815 = vand.u32 %v814, 4294901760
    %816 = vmatpush1.msra.mxu0 %v815
    %v817 = vand.u32 %v131, 4294901760
    %v818 = vsub.f32 %v131, %v817
    %v819 = vand.u32 %v818, 4294901760
    %820 = vmatprep.subr.mxu0 %v819
    %v821 = vand.u32 %v130, 4294901760
    %v822 = vsub.f32 %v130, %v821
    %v823 = vand.u32 %v822, 4294901760
    %824 = vmatpush1.msra.mxu0 %v823
    %v825 = vand.u32 %v133, 4294901760
    %v826 = vsub.f32 %v133, %v825
    %v827 = vand.u32 %v826, 4294901760
    %828 = vmatprep.subr.mxu0 %v827
    %v829 = vand.u32 %v132, 4294901760
    %v830 = vsub.f32 %v132, %v829
    %v831 = vand.u32 %v830, 4294901760
    %832 = vmatpush1.msra.mxu0 %v831
    %v833 = vand.u32 %v135, 4294901760
    %v834 = vsub.f32 %v135, %v833
    %v835 = vand.u32 %v834, 4294901760
    %836 = vmatprep.subr.mxu0 %v835
    %v837 = vand.u32 %v134, 4294901760
    %v838 = vsub.f32 %v134, %v837
    %v839 = vand.u32 %v838, 4294901760
    %840 = vmatpush1.msra.mxu0 %v839
    %v841 = vand.u32 %v137, 4294901760
    %v842 = vsub.f32 %v137, %v841
    %v843 = vand.u32 %v842, 4294901760
    %844 = vmatprep.subr.mxu0 %v843
    %v845 = vand.u32 %v136, 4294901760
    %v846 = vsub.f32 %v136, %v845
    %v847 = vand.u32 %v846, 4294901760
    %848 = vmatpush1.msra.mxu0 %v847
    %849 = vmatprep.subr.mxu0 0.0
    %850 = vmatpush1.msra.mxu0 0.0
    %851 = vmatprep.subr.mxu0 0.0
    %852 = vmatpush1.msra.mxu0 0.0
    %853 = vmatprep.subr.mxu0 0.0
    %854 = vmatpush1.msra.mxu0 0.0
    %855 = vmatprep.subr.mxu0 0.0
    %856 = vmatpush1.msra.mxu0 0.0
    %857 = vmatprep.subr.mxu0 0.0
    %858 = vmatpush1.msra.mxu0 0.0
    %859 = vmatprep.subr.mxu0 0.0
    %860 = vmatpush1.msra.mxu0 0.0
    %861 = vmatprep.subr.mxu0 0.0
    %862 = vmatpush1.msra.mxu0 0.0
    %863 = vmatprep.subr.mxu0 0.0
    %864 = vmatpush1.msra.mxu0 0.0
    %865 = vmatprep.subr.mxu0 0.0
    %866 = vmatpush1.msra.mxu0 0.0
    %867 = vmatprep.subr.mxu0 0.0
    %868 = vmatpush1.msra.mxu0 0.0
    %869 = vmatprep.subr.mxu0 0.0
    %870 = vmatpush1.msra.mxu0 0.0
    %871 = vmatprep.subr.mxu0 0.0
    %872 = vmatpush1.msra.mxu0 0.0
    %873 = vmatprep.subr.mxu0 0.0
    %874 = vmatpush1.msra.mxu0 0.0
    %875 = vmatprep.subr.mxu0 0.0
    %876 = vmatpush1.msra.mxu0 0.0
    %877 = vmatprep.subr.mxu0 0.0
    %878 = vmatpush1.msra.mxu0 0.0
    %879 = vmatprep.subr.mxu0 0.0
    %880 = vmatpush1.msra.mxu0 0.0
    %881 = vmatprep.mubr.f32.mxu0 0.0
    %v882 = vand.u32 %v73, 4294901760
    %883 = vmatmul.mubr.f32.gmra.mrb[0].mxu0 %v882
    %v884 = vpop.f32.mrb[0].mxu0
    %v885 = vadd.f32 %v717, %v884
    %v886 = vpop.f32.mrb[0].mxu0
    %v887 = vadd.f32 %v719, %v886
    %888 = vdwg.mxu0
    %v889 = vand.u32 %v107, 4294901760
    %890 = vmatprep.subr.mxu0 %v889
    %v891 = vand.u32 %v106, 4294901760
    %892 = vmatpush1.msra.mxu0 %v891
    %v893 = vand.u32 %v109, 4294901760
    %894 = vmatprep.subr.mxu0 %v893
    %v895 = vand.u32 %v108, 4294901760
    %896 = vmatpush1.msra.mxu0 %v895
    %v897 = vand.u32 %v111, 4294901760
    %898 = vmatprep.subr.mxu0 %v897
    %v899 = vand.u32 %v110, 4294901760
    %900 = vmatpush1.msra.mxu0 %v899
    %v901 = vand.u32 %v113, 4294901760
    %902 = vmatprep.subr.mxu0 %v901
    %v903 = vand.u32 %v112, 4294901760
    %904 = vmatpush1.msra.mxu0 %v903
    %v905 = vand.u32 %v115, 4294901760
    %906 = vmatprep.subr.mxu0 %v905
    %v907 = vand.u32 %v114, 4294901760
    %908 = vmatpush1.msra.mxu0 %v907
    %v909 = vand.u32 %v117, 4294901760
    %910 = vmatprep.subr.mxu0 %v909
    %v911 = vand.u32 %v116, 4294901760
    %912 = vmatpush1.msra.mxu0 %v911
    %v913 = vand.u32 %v119, 4294901760
    %914 = vmatprep.subr.mxu0 %v913
    %v915 = vand.u32 %v118, 4294901760
    %916 = vmatpush1.msra.mxu0 %v915
    %v917 = vand.u32 %v121, 4294901760
    %918 = vmatprep.subr.mxu0 %v917
    %v919 = vand.u32 %v120, 4294901760
    %920 = vmatpush1.msra.mxu0 %v919
    %v921 = vand.u32 %v123, 4294901760
    %922 = vmatprep.subr.mxu0 %v921
    %v923 = vand.u32 %v122, 4294901760
    %924 = vmatpush1.msra.mxu0 %v923
    %v925 = vand.u32 %v125, 4294901760
    %926 = vmatprep.subr.mxu0 %v925
    %v927 = vand.u32 %v124, 4294901760
    %928 = vmatpush1.msra.mxu0 %v927
    %v929 = vand.u32 %v127, 4294901760
    %930 = vmatprep.subr.mxu0 %v929
    %v931 = vand.u32 %v126, 4294901760
    %932 = vmatpush1.msra.mxu0 %v931
    %v933 = vand.u32 %v129, 4294901760
    %934 = vmatprep.subr.mxu0 %v933
    %v935 = vand.u32 %v128, 4294901760
    %936 = vmatpush1.msra.mxu0 %v935
    %v937 = vand.u32 %v131, 4294901760
    %938 = vmatprep.subr.mxu0 %v937
    %v939 = vand.u32 %v130, 4294901760
    %940 = vmatpush1.msra.mxu0 %v939
    %v941 = vand.u32 %v133, 4294901760
    %942 = vmatprep.subr.mxu0 %v941
    %v943 = vand.u32 %v132, 4294901760
    %944 = vmatpush1.msra.mxu0 %v943
    %v945 = vand.u32 %v135, 4294901760
    %946 = vmatprep.subr.mxu0 %v945
    %v947 = vand.u32 %v134, 4294901760
    %948 = vmatpush1.msra.mxu0 %v947
    %v949 = vand.u32 %v137, 4294901760
    %950 = vmatprep.subr.mxu0 %v949
    %v951 = vand.u32 %v136, 4294901760
    %952 = vmatpush1.msra.mxu0 %v951
    %953 = vmatprep.subr.mxu0 0.0
    %954 = vmatpush1.msra.mxu0 0.0
    %955 = vmatprep.subr.mxu0 0.0
    %956 = vmatpush1.msra.mxu0 0.0
    %957 = vmatprep.subr.mxu0 0.0
    %958 = vmatpush1.msra.mxu0 0.0
    %959 = vmatprep.subr.mxu0 0.0
    %960 = vmatpush1.msra.mxu0 0.0
    %961 = vmatprep.subr.mxu0 0.0
    %962 = vmatpush1.msra.mxu0 0.0
    %963 = vmatprep.subr.mxu0 0.0
    %964 = vmatpush1.msra.mxu0 0.0
    %965 = vmatprep.subr.mxu0 0.0
    %966 = vmatpush1.msra.mxu0 0.0
    %967 = vmatprep.subr.mxu0 0.0
    %968 = vmatpush1.msra.mxu0 0.0
    %969 = vmatprep.subr.mxu0 0.0
    %970 = vmatpush1.msra.mxu0 0.0
    %971 = vmatprep.subr.mxu0 0.0
    %972 = vmatpush1.msra.mxu0 0.0
    %973 = vmatprep.subr.mxu0 0.0
    %974 = vmatpush1.msra.mxu0 0.0
    %975 = vmatprep.subr.mxu0 0.0
    %976 = vmatpush1.msra.mxu0 0.0
    %977 = vmatprep.subr.mxu0 0.0
    %978 = vmatpush1.msra.mxu0 0.0
    %979 = vmatprep.subr.mxu0 0.0
    %980 = vmatpush1.msra.mxu0 0.0
    %981 = vmatprep.subr.mxu0 0.0
    %982 = vmatpush1.msra.mxu0 0.0
    %983 = vmatprep.subr.mxu0 0.0
    %984 = vmatpush1.msra.mxu0 0.0
    %985 = vmatprep.mubr.f32.mxu0 0.0
    %v986 = vand.u32 %v73, 4294901760
    %987 = vmatmul.mubr.f32.gmra.mrb[0].mxu0 %v986
    %v988 = vpop.f32.mrb[0].mxu0
    %v989 = vadd.f32 %v885, %v988
    %v990 = vpop.f32.mrb[0].mxu0
    %v991 = vadd.f32 %v887, %v990
    %992 = vdwg.mxu0
    %v993 = vand.u32 %v75, 4294901760
    %994 = vmatprep.subr.mxu0 %v993
    %v995 = vand.u32 %v74, 4294901760
    %996 = vmatpush1.msra.mxu0 %v995
    %v997 = vand.u32 %v77, 4294901760
    %998 = vmatprep.subr.mxu0 %v997
    %v999 = vand.u32 %v76, 4294901760
    %1000 = vmatpush1.msra.mxu0 %v999
    %v1001 = vand.u32 %v79, 4294901760
    %1002 = vmatprep.subr.mxu0 %v1001
    %v1003 = vand.u32 %v78, 4294901760
    %1004 = vmatpush1.msra.mxu0 %v1003
    %v1005 = vand.u32 %v81, 4294901760
    %1006 = vmatprep.subr.mxu0 %v1005
    %v1007 = vand.u32 %v80, 4294901760
    %1008 = vmatpush1.msra.mxu0 %v1007
    %v1009 = vand.u32 %v83, 4294901760
    %1010 = vmatprep.subr.mxu0 %v1009
    %v1011 = vand.u32 %v82, 4294901760
    %1012 = vmatpush1.msra.mxu0 %v1011
    %v1013 = vand.u32 %v85, 4294901760
    %1014 = vmatprep.subr.mxu0 %v1013
    %v1015 = vand.u32 %v84, 4294901760
    %1016 = vmatpush1.msra.mxu0 %v1015
    %v1017 = vand.u32 %v87, 4294901760
    %1018 = vmatprep.subr.mxu0 %v1017
    %v1019 = vand.u32 %v86, 4294901760
    %1020 = vmatpush1.msra.mxu0 %v1019
    %v1021 = vand.u32 %v89, 4294901760
    %1022 = vmatprep.subr.mxu0 %v1021
    %v1023 = vand.u32 %v88, 4294901760
    %1024 = vmatpush1.msra.mxu0 %v1023
    %v1025 = vand.u32 %v91, 4294901760
    %1026 = vmatprep.subr.mxu0 %v1025
    %v1027 = vand.u32 %v90, 4294901760
    %1028 = vmatpush1.msra.mxu0 %v1027
    %v1029 = vand.u32 %v93, 4294901760
    %1030 = vmatprep.subr.mxu0 %v1029
    %v1031 = vand.u32 %v92, 4294901760
    %1032 = vmatpush1.msra.mxu0 %v1031
    %v1033 = vand.u32 %v95, 4294901760
    %1034 = vmatprep.subr.mxu0 %v1033
    %v1035 = vand.u32 %v94, 4294901760
    %1036 = vmatpush1.msra.mxu0 %v1035
    %v1037 = vand.u32 %v97, 4294901760
    %1038 = vmatprep.subr.mxu0 %v1037
    %v1039 = vand.u32 %v96, 4294901760
    %1040 = vmatpush1.msra.mxu0 %v1039
    %v1041 = vand.u32 %v99, 4294901760
    %1042 = vmatprep.subr.mxu0 %v1041
    %v1043 = vand.u32 %v98, 4294901760
    %1044 = vmatpush1.msra.mxu0 %v1043
    %v1045 = vand.u32 %v101, 4294901760
    %1046 = vmatprep.subr.mxu0 %v1045
    %v1047 = vand.u32 %v100, 4294901760
    %1048 = vmatpush1.msra.mxu0 %v1047
    %v1049 = vand.u32 %v103, 4294901760
    %1050 = vmatprep.subr.mxu0 %v1049
    %v1051 = vand.u32 %v102, 4294901760
    %1052 = vmatpush1.msra.mxu0 %v1051
    %v1053 = vand.u32 %v105, 4294901760
    %1054 = vmatprep.subr.mxu0 %v1053
    %v1055 = vand.u32 %v104, 4294901760
    %1056 = vmatpush1.msra.mxu0 %v1055
    %1057 = vmatprep.subr.mxu0 0.0
    %1058 = vmatpush1.msra.mxu0 0.0
    %1059 = vmatprep.subr.mxu0 0.0
    %1060 = vmatpush1.msra.mxu0 0.0
    %1061 = vmatprep.subr.mxu0 0.0
    %1062 = vmatpush1.msra.mxu0 0.0
    %1063 = vmatprep.subr.mxu0 0.0
    %1064 = vmatpush1.msra.mxu0 0.0
    %1065 = vmatprep.subr.mxu0 0.0
    %1066 = vmatpush1.msra.mxu0 0.0
    %1067 = vmatprep.subr.mxu0 0.0
    %1068 = vmatpush1.msra.mxu0 0.0
    %1069 = vmatprep.subr.mxu0 0.0
    %1070 = vmatpush1.msra.mxu0 0.0
    %1071 = vmatprep.subr.mxu0 0.0
    %1072 = vmatpush1.msra.mxu0 0.0
    %1073 = vmatprep.subr.mxu0 0.0
    %1074 = vmatpush1.msra.mxu0 0.0
    %1075 = vmatprep.subr.mxu0 0.0
    %1076 = vmatpush1.msra.mxu0 0.0
    %1077 = vmatprep.subr.mxu0 0.0
    %1078 = vmatpush1.msra.mxu0 0.0
    %1079 = vmatprep.subr.mxu0 0.0
    %1080 = vmatpush1.msra.mxu0 0.0
    %1081 = vmatprep.subr.mxu0 0.0
    %1082 = vmatpush1.msra.mxu0 0.0
    %1083 = vmatprep.subr.mxu0 0.0
    %1084 = vmatpush1.msra.mxu0 0.0
    %1085 = vmatprep.subr.mxu0 0.0
    %1086 = vmatpush1.msra.mxu0 0.0
    %1087 = vmatprep.subr.mxu0 0.0
    %1088 = vmatpush1.msra.mxu0 0.0
    %1089 = vmatprep.mubr.f32.mxu0 0.0
    %v1090 = vand.u32 %v72, 4294901760
    %v1091 = vsub.f32 %v72, %v1090
    %v1092 = vand.u32 %v1091, 4294901760
    %v1093 = vsub.f32 %v1091, %v1092
    %v1094 = vand.u32 %v1093, 4294901760
    %1095 = vmatmul.mubr.f32.gmra.mrb[0].mxu0 %v1094
    %v1096 = vpop.f32.mrb[0].mxu0
    %v1097 = vadd.f32 %v989, %v1096
    %v1098 = vpop.f32.mrb[0].mxu0
    %v1099 = vadd.f32 %v991, %v1098
    %1100 = vdwg.mxu0
    %v1101 = vand.u32 %v75, 4294901760
    %v1102 = vsub.f32 %v75, %v1101
    %v1103 = vand.u32 %v1102, 4294901760
    %v1104 = vsub.f32 %v1102, %v1103
    %v1105 = vand.u32 %v1104, 4294901760
    %1106 = vmatprep.subr.mxu0 %v1105
    %v1107 = vand.u32 %v74, 4294901760
    %v1108 = vsub.f32 %v74, %v1107
    %v1109 = vand.u32 %v1108, 4294901760
    %v1110 = vsub.f32 %v1108, %v1109
    %v1111 = vand.u32 %v1110, 4294901760
    %1112 = vmatpush1.msra.mxu0 %v1111
    %v1113 = vand.u32 %v77, 4294901760
    %v1114 = vsub.f32 %v77, %v1113
    %v1115 = vand.u32 %v1114, 4294901760
    %v1116 = vsub.f32 %v1114, %v1115
    %v1117 = vand.u32 %v1116, 4294901760
    %1118 = vmatprep.subr.mxu0 %v1117
    %v1119 = vand.u32 %v76, 4294901760
    %v1120 = vsub.f32 %v76, %v1119
    %v1121 = vand.u32 %v1120, 4294901760
    %v1122 = vsub.f32 %v1120, %v1121
    %v1123 = vand.u32 %v1122, 4294901760
    %1124 = vmatpush1.msra.mxu0 %v1123
    %v1125 = vand.u32 %v79, 4294901760
    %v1126 = vsub.f32 %v79, %v1125
    %v1127 = vand.u32 %v1126, 4294901760
    %v1128 = vsub.f32 %v1126, %v1127
    %v1129 = vand.u32 %v1128, 4294901760
    %1130 = vmatprep.subr.mxu0 %v1129
    %v1131 = vand.u32 %v78, 4294901760
    %v1132 = vsub.f32 %v78, %v1131
    %v1133 = vand.u32 %v1132, 4294901760
    %v1134 = vsub.f32 %v1132, %v1133
    %v1135 = vand.u32 %v1134, 4294901760
    %1136 = vmatpush1.msra.mxu0 %v1135
    %v1137 = vand.u32 %v81, 4294901760
    %v1138 = vsub.f32 %v81, %v1137
    %v1139 = vand.u32 %v1138, 4294901760
    %v1140 = vsub.f32 %v1138, %v1139
    %v1141 = vand.u32 %v1140, 4294901760
    %1142 = vmatprep.subr.mxu0 %v1141
    %v1143 = vand.u32 %v80, 4294901760
    %v1144 = vsub.f32 %v80, %v1143
    %v1145 = vand.u32 %v1144, 4294901760
    %v1146 = vsub.f32 %v1144, %v1145
    %v1147 = vand.u32 %v1146, 4294901760
    %1148 = vmatpush1.msra.mxu0 %v1147
    %v1149 = vand.u32 %v83, 4294901760
    %v1150 = vsub.f32 %v83, %v1149
    %v1151 = vand.u32 %v1150, 4294901760
    %v1152 = vsub.f32 %v1150, %v1151
    %v1153 = vand.u32 %v1152, 4294901760
    %1154 = vmatprep.subr.mxu0 %v1153
    %v1155 = vand.u32 %v82, 4294901760
    %v1156 = vsub.f32 %v82, %v1155
    %v1157 = vand.u32 %v1156, 4294901760
    %v1158 = vsub.f32 %v1156, %v1157
    %v1159 = vand.u32 %v1158, 4294901760
    %1160 = vmatpush1.msra.mxu0 %v1159
    %v1161 = vand.u32 %v85, 4294901760
    %v1162 = vsub.f32 %v85, %v1161
    %v1163 = vand.u32 %v1162, 4294901760
    %v1164 = vsub.f32 %v1162, %v1163
    %v1165 = vand.u32 %v1164, 4294901760
    %1166 = vmatprep.subr.mxu0 %v1165
    %v1167 = vand.u32 %v84, 4294901760
    %v1168 = vsub.f32 %v84, %v1167
    %v1169 = vand.u32 %v1168, 4294901760
    %v1170 = vsub.f32 %v1168, %v1169
    %v1171 = vand.u32 %v1170, 4294901760
    %1172 = vmatpush1.msra.mxu0 %v1171
    %v1173 = vand.u32 %v87, 4294901760
    %v1174 = vsub.f32 %v87, %v1173
    %v1175 = vand.u32 %v1174, 4294901760
    %v1176 = vsub.f32 %v1174, %v1175
    %v1177 = vand.u32 %v1176, 4294901760
    %1178 = vmatprep.subr.mxu0 %v1177
    %v1179 = vand.u32 %v86, 4294901760
    %v1180 = vsub.f32 %v86, %v1179
    %v1181 = vand.u32 %v1180, 4294901760
    %v1182 = vsub.f32 %v1180, %v1181
    %v1183 = vand.u32 %v1182, 4294901760
    %1184 = vmatpush1.msra.mxu0 %v1183
    %v1185 = vand.u32 %v89, 4294901760
    %v1186 = vsub.f32 %v89, %v1185
    %v1187 = vand.u32 %v1186, 4294901760
    %v1188 = vsub.f32 %v1186, %v1187
    %v1189 = vand.u32 %v1188, 4294901760
    %1190 = vmatprep.subr.mxu0 %v1189
    %v1191 = vand.u32 %v88, 4294901760
    %v1192 = vsub.f32 %v88, %v1191
    %v1193 = vand.u32 %v1192, 4294901760
    %v1194 = vsub.f32 %v1192, %v1193
    %v1195 = vand.u32 %v1194, 4294901760
    %1196 = vmatpush1.msra.mxu0 %v1195
    %v1197 = vand.u32 %v91, 4294901760
    %v1198 = vsub.f32 %v91, %v1197
    %v1199 = vand.u32 %v1198, 4294901760
    %v1200 = vsub.f32 %v1198, %v1199
    %v1201 = vand.u32 %v1200, 4294901760
    %1202 = vmatprep.subr.mxu0 %v1201
    %v1203 = vand.u32 %v90, 4294901760
    %v1204 = vsub.f32 %v90, %v1203
    %v1205 = vand.u32 %v1204, 4294901760
    %v1206 = vsub.f32 %v1204, %v1205
    %v1207 = vand.u32 %v1206, 4294901760
    %1208 = vmatpush1.msra.mxu0 %v1207
    %v1209 = vand.u32 %v93, 4294901760
    %v1210 = vsub.f32 %v93, %v1209
    %v1211 = vand.u32 %v1210, 4294901760
    %v1212 = vsub.f32 %v1210, %v1211
    %v1213 = vand.u32 %v1212, 4294901760
    %1214 = vmatprep.subr.mxu0 %v1213
    %v1215 = vand.u32 %v92, 4294901760
    %v1216 = vsub.f32 %v92, %v1215
    %v1217 = vand.u32 %v1216, 4294901760
    %v1218 = vsub.f32 %v1216, %v1217
    %v1219 = vand.u32 %v1218, 4294901760
    %1220 = vmatpush1.msra.mxu0 %v1219
    %v1221 = vand.u32 %v95, 4294901760
    %v1222 = vsub.f32 %v95, %v1221
    %v1223 = vand.u32 %v1222, 4294901760
    %v1224 = vsub.f32 %v1222, %v1223
    %v1225 = vand.u32 %v1224, 4294901760
    %1226 = vmatprep.subr.mxu0 %v1225
    %v1227 = vand.u32 %v94, 4294901760
    %v1228 = vsub.f32 %v94, %v1227
    %v1229 = vand.u32 %v1228, 4294901760
    %v1230 = vsub.f32 %v1228, %v1229
    %v1231 = vand.u32 %v1230, 4294901760
    %1232 = vmatpush1.msra.mxu0 %v1231
    %v1233 = vand.u32 %v97, 4294901760
    %v1234 = vsub.f32 %v97, %v1233
    %v1235 = vand.u32 %v1234, 4294901760
    %v1236 = vsub.f32 %v1234, %v1235
    %v1237 = vand.u32 %v1236, 4294901760
    %1238 = vmatprep.subr.mxu0 %v1237
    %v1239 = vand.u32 %v96, 4294901760
    %v1240 = vsub.f32 %v96, %v1239
    %v1241 = vand.u32 %v1240, 4294901760
    %v1242 = vsub.f32 %v1240, %v1241
    %v1243 = vand.u32 %v1242, 4294901760
    %1244 = vmatpush1.msra.mxu0 %v1243
    %v1245 = vand.u32 %v99, 4294901760
    %v1246 = vsub.f32 %v99, %v1245
    %v1247 = vand.u32 %v1246, 4294901760
    %v1248 = vsub.f32 %v1246, %v1247
    %v1249 = vand.u32 %v1248, 4294901760
    %1250 = vmatprep.subr.mxu0 %v1249
    %v1251 = vand.u32 %v98, 4294901760
    %v1252 = vsub.f32 %v98, %v1251
    %v1253 = vand.u32 %v1252, 4294901760
    %v1254 = vsub.f32 %v1252, %v1253
    %v1255 = vand.u32 %v1254, 4294901760
    %1256 = vmatpush1.msra.mxu0 %v1255
    %v1257 = vand.u32 %v101, 4294901760
    %v1258 = vsub.f32 %v101, %v1257
    %v1259 = vand.u32 %v1258, 4294901760
    %v1260 = vsub.f32 %v1258, %v1259
    %v1261 = vand.u32 %v1260, 4294901760
    %1262 = vmatprep.subr.mxu0 %v1261
    %v1263 = vand.u32 %v100, 4294901760
    %v1264 = vsub.f32 %v100, %v1263
    %v1265 = vand.u32 %v1264, 4294901760
    %v1266 = vsub.f32 %v1264, %v1265
    %v1267 = vand.u32 %v1266, 4294901760
    %1268 = vmatpush1.msra.mxu0 %v1267
    %v1269 = vand.u32 %v103, 4294901760
    %v1270 = vsub.f32 %v103, %v1269
    %v1271 = vand.u32 %v1270, 4294901760
    %v1272 = vsub.f32 %v1270, %v1271
    %v1273 = vand.u32 %v1272, 4294901760
    %1274 = vmatprep.subr.mxu0 %v1273
    %v1275 = vand.u32 %v102, 4294901760
    %v1276 = vsub.f32 %v102, %v1275
    %v1277 = vand.u32 %v1276, 4294901760
    %v1278 = vsub.f32 %v1276, %v1277
    %v1279 = vand.u32 %v1278, 4294901760
    %1280 = vmatpush1.msra.mxu0 %v1279
    %v1281 = vand.u32 %v105, 4294901760
    %v1282 = vsub.f32 %v105, %v1281
    %v1283 = vand.u32 %v1282, 4294901760
    %v1284 = vsub.f32 %v1282, %v1283
    %v1285 = vand.u32 %v1284, 4294901760
    %1286 = vmatprep.subr.mxu0 %v1285
    %v1287 = vand.u32 %v104, 4294901760
    %v1288 = vsub.f32 %v104, %v1287
    %v1289 = vand.u32 %v1288, 4294901760
    %v1290 = vsub.f32 %v1288, %v1289
    %v1291 = vand.u32 %v1290, 4294901760
    %1292 = vmatpush1.msra.mxu0 %v1291
    %1293 = vmatprep.subr.mxu0 0.0
    %1294 = vmatpush1.msra.mxu0 0.0
    %1295 = vmatprep.subr.mxu0 0.0
    %1296 = vmatpush1.msra.mxu0 0.0
    %1297 = vmatprep.subr.mxu0 0.0
    %1298 = vmatpush1.msra.mxu0 0.0
    %1299 = vmatprep.subr.mxu0 0.0
    %1300 = vmatpush1.msra.mxu0 0.0
    %1301 = vmatprep.subr.mxu0 0.0
    %1302 = vmatpush1.msra.mxu0 0.0
    %1303 = vmatprep.subr.mxu0 0.0
    %1304 = vmatpush1.msra.mxu0 0.0
    %1305 = vmatprep.subr.mxu0 0.0
    %1306 = vmatpush1.msra.mxu0 0.0
    %1307 = vmatprep.subr.mxu0 0.0
    %1308 = vmatpush1.msra.mxu0 0.0
    %1309 = vmatprep.subr.mxu0 0.0
    %1310 = vmatpush1.msra.mxu0 0.0
    %1311 = vmatprep.subr.mxu0 0.0
    %1312 = vmatpush1.msra.mxu0 0.0
    %1313 = vmatprep.subr.mxu0 0.0
    %1314 = vmatpush1.msra.mxu0 0.0
    %1315 = vmatprep.subr.mxu0 0.0
    %1316 = vmatpush1.msra.mxu0 0.0
    %1317 = vmatprep.subr.mxu0 0.0
    %1318 = vmatpush1.msra.mxu0 0.0
    %1319 = vmatprep.subr.mxu0 0.0
    %1320 = vmatpush1.msra.mxu0 0.0
    %1321 = vmatprep.subr.mxu0 0.0
    %1322 = vmatpush1.msra.mxu0 0.0
    %1323 = vmatprep.subr.mxu0 0.0
    %1324 = vmatpush1.msra.mxu0 0.0
    %1325 = vmatprep.mubr.f32.mxu0 0.0
    %v1326 = vand.u32 %v72, 4294901760
    %1327 = vmatmul.mubr.f32.gmra.mrb[0].mxu0 %v1326
    %v1328 = vpop.f32.mrb[0].mxu0
    %v1329 = vadd.f32 %v1097, %v1328
    %v1330 = vpop.f32.mrb[0].mxu0
    %v1331 = vadd.f32 %v1099, %v1330
    %1332 = vdwg.mxu0
    %v1333 = vand.u32 %v75, 4294901760
    %v1334 = vsub.f32 %v75, %v1333
    %1335 = vmatprep.subr.mxu0 %v1334
    %v1336 = vand.u32 %v74, 4294901760
    %v1337 = vsub.f32 %v74, %v1336
    %1338 = vmatpush1.msra.mxu0 %v1337
    %v1339 = vand.u32 %v77, 4294901760
    %v1340 = vsub.f32 %v77, %v1339
    %1341 = vmatprep.subr.mxu0 %v1340
    %v1342 = vand.u32 %v76, 4294901760
    %v1343 = vsub.f32 %v76, %v1342
    %1344 = vmatpush1.msra.mxu0 %v1343
    %v1345 = vand.u32 %v79, 4294901760
    %v1346 = vsub.f32 %v79, %v1345
    %1347 = vmatprep.subr.mxu0 %v1346
    %v1348 = vand.u32 %v78, 4294901760
    %v1349 = vsub.f32 %v78, %v1348
    %1350 = vmatpush1.msra.mxu0 %v1349
    %v1351 = vand.u32 %v81, 4294901760
    %v1352 = vsub.f32 %v81, %v1351
    %1353 = vmatprep.subr.mxu0 %v1352
    %v1354 = vand.u32 %v80, 4294901760
    %v1355 = vsub.f32 %v80, %v1354
    %1356 = vmatpush1.msra.mxu0 %v1355
    %v1357 = vand.u32 %v83, 4294901760
    %v1358 = vsub.f32 %v83, %v1357
    %1359 = vmatprep.subr.mxu0 %v1358
    %v1360 = vand.u32 %v82, 4294901760
    %v1361 = vsub.f32 %v82, %v1360
    %1362 = vmatpush1.msra.mxu0 %v1361
    %v1363 = vand.u32 %v85, 4294901760
    %v1364 = vsub.f32 %v85, %v1363
    %1365 = vmatprep.subr.mxu0 %v1364
    %v1366 = vand.u32 %v84, 4294901760
    %v1367 = vsub.f32 %v84, %v1366
    %1368 = vmatpush1.msra.mxu0 %v1367
    %v1369 = vand.u32 %v87, 4294901760
    %v1370 = vsub.f32 %v87, %v1369
    %1371 = vmatprep.subr.mxu0 %v1370
    %v1372 = vand.u32 %v86, 4294901760
    %v1373 = vsub.f32 %v86, %v1372
    %1374 = vmatpush1.msra.mxu0 %v1373
    %v1375 = vand.u32 %v89, 4294901760
    %v1376 = vsub.f32 %v89, %v1375
    %1377 = vmatprep.subr.mxu0 %v1376
    %v1378 = vand.u32 %v88, 4294901760
    %v1379 = vsub.f32 %v88, %v1378
    %1380 = vmatpush1.msra.mxu0 %v1379
    %v1381 = vand.u32 %v91, 4294901760
    %v1382 = vsub.f32 %v91, %v1381
    %1383 = vmatprep.subr.mxu0 %v1382
    %v1384 = vand.u32 %v90, 4294901760
    %v1385 = vsub.f32 %v90, %v1384
    %1386 = vmatpush1.msra.mxu0 %v1385
    %v1387 = vand.u32 %v93, 4294901760
    %v1388 = vsub.f32 %v93, %v1387
    %1389 = vmatprep.subr.mxu0 %v1388
    %v1390 = vand.u32 %v92, 4294901760
    %v1391 = vsub.f32 %v92, %v1390
    %1392 = vmatpush1.msra.mxu0 %v1391
    %v1393 = vand.u32 %v95, 4294901760
    %v1394 = vsub.f32 %v95, %v1393
    %1395 = vmatprep.subr.mxu0 %v1394
    %v1396 = vand.u32 %v94, 4294901760
    %v1397 = vsub.f32 %v94, %v1396
    %1398 = vmatpush1.msra.mxu0 %v1397
    %v1399 = vand.u32 %v97, 4294901760
    %v1400 = vsub.f32 %v97, %v1399
    %1401 = vmatprep.subr.mxu0 %v1400
    %v1402 = vand.u32 %v96, 4294901760
    %v1403 = vsub.f32 %v96, %v1402
    %1404 = vmatpush1.msra.mxu0 %v1403
    %v1405 = vand.u32 %v99, 4294901760
    %v1406 = vsub.f32 %v99, %v1405
    %1407 = vmatprep.subr.mxu0 %v1406
    %v1408 = vand.u32 %v98, 4294901760
    %v1409 = vsub.f32 %v98, %v1408
    %1410 = vmatpush1.msra.mxu0 %v1409
    %v1411 = vand.u32 %v101, 4294901760
    %v1412 = vsub.f32 %v101, %v1411
    %1413 = vmatprep.subr.mxu0 %v1412
    %v1414 = vand.u32 %v100, 4294901760
    %v1415 = vsub.f32 %v100, %v1414
    %1416 = vmatpush1.msra.mxu0 %v1415
    %v1417 = vand.u32 %v103, 4294901760
    %v1418 = vsub.f32 %v103, %v1417
    %1419 = vmatprep.subr.mxu0 %v1418
    %v1420 = vand.u32 %v102, 4294901760
    %v1421 = vsub.f32 %v102, %v1420
    %1422 = vmatpush1.msra.mxu0 %v1421
    %v1423 = vand.u32 %v105, 4294901760
    %v1424 = vsub.f32 %v105, %v1423
    %1425 = vmatprep.subr.mxu0 %v1424
    %v1426 = vand.u32 %v104, 4294901760
    %v1427 = vsub.f32 %v104, %v1426
    %1428 = vmatpush1.msra.mxu0 %v1427
    %1429 = vmatprep.subr.mxu0 0.0
    %1430 = vmatpush1.msra.mxu0 0.0
    %1431 = vmatprep.subr.mxu0 0.0
    %1432 = vmatpush1.msra.mxu0 0.0
    %1433 = vmatprep.subr.mxu0 0.0
    %1434 = vmatpush1.msra.mxu0 0.0
    %1435 = vmatprep.subr.mxu0 0.0
    %1436 = vmatpush1.msra.mxu0 0.0
    %1437 = vmatprep.subr.mxu0 0.0
    %1438 = vmatpush1.msra.mxu0 0.0
    %1439 = vmatprep.subr.mxu0 0.0
    %1440 = vmatpush1.msra.mxu0 0.0
    %1441 = vmatprep.subr.mxu0 0.0
    %1442 = vmatpush1.msra.mxu0 0.0
    %1443 = vmatprep.subr.mxu0 0.0
    %1444 = vmatpush1.msra.mxu0 0.0
    %1445 = vmatprep.subr.mxu0 0.0
    %1446 = vmatpush1.msra.mxu0 0.0
    %1447 = vmatprep.subr.mxu0 0.0
    %1448 = vmatpush1.msra.mxu0 0.0
    %1449 = vmatprep.subr.mxu0 0.0
    %1450 = vmatpush1.msra.mxu0 0.0
    %1451 = vmatprep.subr.mxu0 0.0
    %1452 = vmatpush1.msra.mxu0 0.0
    %1453 = vmatprep.subr.mxu0 0.0
    %1454 = vmatpush1.msra.mxu0 0.0
    %1455 = vmatprep.subr.mxu0 0.0
    %1456 = vmatpush1.msra.mxu0 0.0
    %1457 = vmatprep.subr.mxu0 0.0
    %1458 = vmatpush1.msra.mxu0 0.0
    %1459 = vmatprep.subr.mxu0 0.0
    %1460 = vmatpush1.msra.mxu0 0.0
    %1461 = vmatprep.mubr.f32.mxu0 0.0
    %v1462 = vand.u32 %v72, 4294901760
    %v1463 = vsub.f32 %v72, %v1462
    %1464 = vmatmul.mubr.f32.gmra.mrb[0].mxu0 %v1463
    %v1465 = vpop.f32.mrb[0].mxu0
    %v1466 = vadd.f32 %v1329, %v1465
    %v1467 = vpop.f32.mrb[0].mxu0
    %v1468 = vadd.f32 %v1331, %v1467
    %1469 = vdwg.mxu0
    %v1470 = vand.u32 %v75, 4294901760
    %1471 = vmatprep.subr.mxu0 %v1470
    %v1472 = vand.u32 %v74, 4294901760
    %1473 = vmatpush1.msra.mxu0 %v1472
    %v1474 = vand.u32 %v77, 4294901760
    %1475 = vmatprep.subr.mxu0 %v1474
    %v1476 = vand.u32 %v76, 4294901760
    %1477 = vmatpush1.msra.mxu0 %v1476
    %v1478 = vand.u32 %v79, 4294901760
    %1479 = vmatprep.subr.mxu0 %v1478
    %v1480 = vand.u32 %v78, 4294901760
    %1481 = vmatpush1.msra.mxu0 %v1480
    %v1482 = vand.u32 %v81, 4294901760
    %1483 = vmatprep.subr.mxu0 %v1482
    %v1484 = vand.u32 %v80, 4294901760
    %1485 = vmatpush1.msra.mxu0 %v1484
    %v1486 = vand.u32 %v83, 4294901760
    %1487 = vmatprep.subr.mxu0 %v1486
    %v1488 = vand.u32 %v82, 4294901760
    %1489 = vmatpush1.msra.mxu0 %v1488
    %v1490 = vand.u32 %v85, 4294901760
    %1491 = vmatprep.subr.mxu0 %v1490
    %v1492 = vand.u32 %v84, 4294901760
    %1493 = vmatpush1.msra.mxu0 %v1492
    %v1494 = vand.u32 %v87, 4294901760
    %1495 = vmatprep.subr.mxu0 %v1494
    %v1496 = vand.u32 %v86, 4294901760
    %1497 = vmatpush1.msra.mxu0 %v1496
    %v1498 = vand.u32 %v89, 4294901760
    %1499 = vmatprep.subr.mxu0 %v1498
    %v1500 = vand.u32 %v88, 4294901760
    %1501 = vmatpush1.msra.mxu0 %v1500
    %v1502 = vand.u32 %v91, 4294901760
    %1503 = vmatprep.subr.mxu0 %v1502
    %v1504 = vand.u32 %v90, 4294901760
    %1505 = vmatpush1.msra.mxu0 %v1504
    %v1506 = vand.u32 %v93, 4294901760
    %1507 = vmatprep.subr.mxu0 %v1506
    %v1508 = vand.u32 %v92, 4294901760
    %1509 = vmatpush1.msra.mxu0 %v1508
    %v1510 = vand.u32 %v95, 4294901760
    %1511 = vmatprep.subr.mxu0 %v1510
    %v1512 = vand.u32 %v94, 4294901760
    %1513 = vmatpush1.msra.mxu0 %v1512
    %v1514 = vand.u32 %v97, 4294901760
    %1515 = vmatprep.subr.mxu0 %v1514
    %v1516 = vand.u32 %v96, 4294901760
    %1517 = vmatpush1.msra.mxu0 %v1516
    %v1518 = vand.u32 %v99, 4294901760
    %1519 = vmatprep.subr.mxu0 %v1518
    %v1520 = vand.u32 %v98, 4294901760
    %1521 = vmatpush1.msra.mxu0 %v1520
    %v1522 = vand.u32 %v101, 4294901760
    %1523 = vmatprep.subr.mxu0 %v1522
    %v1524 = vand.u32 %v100, 4294901760
    %1525 = vmatpush1.msra.mxu0 %v1524
    %v1526 = vand.u32 %v103, 4294901760
    %1527 = vmatprep.subr.mxu0 %v1526
    %v1528 = vand.u32 %v102, 4294901760
    %1529 = vmatpush1.msra.mxu0 %v1528
    %v1530 = vand.u32 %v105, 4294901760
    %1531 = vmatprep.subr.mxu0 %v1530
    %v1532 = vand.u32 %v104, 4294901760
    %1533 = vmatpush1.msra.mxu0 %v1532
    %1534 = vmatprep.subr.mxu0 0.0
    %1535 = vmatpush1.msra.mxu0 0.0
    %1536 = vmatprep.subr.mxu0 0.0
    %1537 = vmatpush1.msra.mxu0 0.0
    %1538 = vmatprep.subr.mxu0 0.0
    %1539 = vmatpush1.msra.mxu0 0.0
    %1540 = vmatprep.subr.mxu0 0.0
    %1541 = vmatpush1.msra.mxu0 0.0
    %1542 = vmatprep.subr.mxu0 0.0
    %1543 = vmatpush1.msra.mxu0 0.0
    %1544 = vmatprep.subr.mxu0 0.0
    %1545 = vmatpush1.msra.mxu0 0.0
    %1546 = vmatprep.subr.mxu0 0.0
    %1547 = vmatpush1.msra.mxu0 0.0
    %1548 = vmatprep.subr.mxu0 0.0
    %1549 = vmatpush1.msra.mxu0 0.0
    %1550 = vmatprep.subr.mxu0 0.0
    %1551 = vmatpush1.msra.mxu0 0.0
    %1552 = vmatprep.subr.mxu0 0.0
    %1553 = vmatpush1.msra.mxu0 0.0
    %1554 = vmatprep.subr.mxu0 0.0
    %1555 = vmatpush1.msra.mxu0 0.0
    %1556 = vmatprep.subr.mxu0 0.0
    %1557 = vmatpush1.msra.mxu0 0.0
    %1558 = vmatprep.subr.mxu0 0.0
    %1559 = vmatpush1.msra.mxu0 0.0
    %1560 = vmatprep.subr.mxu0 0.0
    %1561 = vmatpush1.msra.mxu0 0.0
    %1562 = vmatprep.subr.mxu0 0.0
    %1563 = vmatpush1.msra.mxu0 0.0
    %1564 = vmatprep.subr.mxu0 0.0
    %1565 = vmatpush1.msra.mxu0 0.0
    %1566 = vmatprep.mubr.f32.mxu0 0.0
    %v1567 = vand.u32 %v72, 4294901760
    %v1568 = vsub.f32 %v72, %v1567
    %v1569 = vand.u32 %v1568, 4294901760
    %1570 = vmatmul.mubr.f32.gmra.mrb[0].mxu0 %v1569
    %v1571 = vpop.f32.mrb[0].mxu0
    %v1572 = vadd.f32 %v1466, %v1571
    %v1573 = vpop.f32.mrb[0].mxu0
    %v1574 = vadd.f32 %v1468, %v1573
    %1575 = vdwg.mxu0
    %v1576 = vand.u32 %v75, 4294901760
    %v1577 = vsub.f32 %v75, %v1576
    %v1578 = vand.u32 %v1577, 4294901760
    %1579 = vmatprep.subr.mxu0 %v1578
    %v1580 = vand.u32 %v74, 4294901760
    %v1581 = vsub.f32 %v74, %v1580
    %v1582 = vand.u32 %v1581, 4294901760
    %1583 = vmatpush1.msra.mxu0 %v1582
    %v1584 = vand.u32 %v77, 4294901760
    %v1585 = vsub.f32 %v77, %v1584
    %v1586 = vand.u32 %v1585, 4294901760
    %1587 = vmatprep.subr.mxu0 %v1586
    %v1588 = vand.u32 %v76, 4294901760
    %v1589 = vsub.f32 %v76, %v1588
    %v1590 = vand.u32 %v1589, 4294901760
    %1591 = vmatpush1.msra.mxu0 %v1590
    %v1592 = vand.u32 %v79, 4294901760
    %v1593 = vsub.f32 %v79, %v1592
    %v1594 = vand.u32 %v1593, 4294901760
    %1595 = vmatprep.subr.mxu0 %v1594
    %v1596 = vand.u32 %v78, 4294901760
    %v1597 = vsub.f32 %v78, %v1596
    %v1598 = vand.u32 %v1597, 4294901760
    %1599 = vmatpush1.msra.mxu0 %v1598
    %v1600 = vand.u32 %v81, 4294901760
    %v1601 = vsub.f32 %v81, %v1600
    %v1602 = vand.u32 %v1601, 4294901760
    %1603 = vmatprep.subr.mxu0 %v1602
    %v1604 = vand.u32 %v80, 4294901760
    %v1605 = vsub.f32 %v80, %v1604
    %v1606 = vand.u32 %v1605, 4294901760
    %1607 = vmatpush1.msra.mxu0 %v1606
    %v1608 = vand.u32 %v83, 4294901760
    %v1609 = vsub.f32 %v83, %v1608
    %v1610 = vand.u32 %v1609, 4294901760
    %1611 = vmatprep.subr.mxu0 %v1610
    %v1612 = vand.u32 %v82, 4294901760
    %v1613 = vsub.f32 %v82, %v1612
    %v1614 = vand.u32 %v1613, 4294901760
    %1615 = vmatpush1.msra.mxu0 %v1614
    %v1616 = vand.u32 %v85, 4294901760
    %v1617 = vsub.f32 %v85, %v1616
    %v1618 = vand.u32 %v1617, 4294901760
    %1619 = vmatprep.subr.mxu0 %v1618
    %v1620 = vand.u32 %v84, 4294901760
    %v1621 = vsub.f32 %v84, %v1620
    %v1622 = vand.u32 %v1621, 4294901760
    %1623 = vmatpush1.msra.mxu0 %v1622
    %v1624 = vand.u32 %v87, 4294901760
    %v1625 = vsub.f32 %v87, %v1624
    %v1626 = vand.u32 %v1625, 4294901760
    %1627 = vmatprep.subr.mxu0 %v1626
    %v1628 = vand.u32 %v86, 4294901760
    %v1629 = vsub.f32 %v86, %v1628
    %v1630 = vand.u32 %v1629, 4294901760
    %1631 = vmatpush1.msra.mxu0 %v1630
    %v1632 = vand.u32 %v89, 4294901760
    %v1633 = vsub.f32 %v89, %v1632
    %v1634 = vand.u32 %v1633, 4294901760
    %1635 = vmatprep.subr.mxu0 %v1634
    %v1636 = vand.u32 %v88, 4294901760
    %v1637 = vsub.f32 %v88, %v1636
    %v1638 = vand.u32 %v1637, 4294901760
    %1639 = vmatpush1.msra.mxu0 %v1638
    %v1640 = vand.u32 %v91, 4294901760
    %v1641 = vsub.f32 %v91, %v1640
    %v1642 = vand.u32 %v1641, 4294901760
    %1643 = vmatprep.subr.mxu0 %v1642
    %v1644 = vand.u32 %v90, 4294901760
    %v1645 = vsub.f32 %v90, %v1644
    %v1646 = vand.u32 %v1645, 4294901760
    %1647 = vmatpush1.msra.mxu0 %v1646
    %v1648 = vand.u32 %v93, 4294901760
    %v1649 = vsub.f32 %v93, %v1648
    %v1650 = vand.u32 %v1649, 4294901760
    %1651 = vmatprep.subr.mxu0 %v1650
    %v1652 = vand.u32 %v92, 4294901760
    %v1653 = vsub.f32 %v92, %v1652
    %v1654 = vand.u32 %v1653, 4294901760
    %1655 = vmatpush1.msra.mxu0 %v1654
    %v1656 = vand.u32 %v95, 4294901760
    %v1657 = vsub.f32 %v95, %v1656
    %v1658 = vand.u32 %v1657, 4294901760
    %1659 = vmatprep.subr.mxu0 %v1658
    %v1660 = vand.u32 %v94, 4294901760
    %v1661 = vsub.f32 %v94, %v1660
    %v1662 = vand.u32 %v1661, 4294901760
    %1663 = vmatpush1.msra.mxu0 %v1662
    %v1664 = vand.u32 %v97, 4294901760
    %v1665 = vsub.f32 %v97, %v1664
    %v1666 = vand.u32 %v1665, 4294901760
    %1667 = vmatprep.subr.mxu0 %v1666
    %v1668 = vand.u32 %v96, 4294901760
    %v1669 = vsub.f32 %v96, %v1668
    %v1670 = vand.u32 %v1669, 4294901760
    %1671 = vmatpush1.msra.mxu0 %v1670
    %v1672 = vand.u32 %v99, 4294901760
    %v1673 = vsub.f32 %v99, %v1672
    %v1674 = vand.u32 %v1673, 4294901760
    %1675 = vmatprep.subr.mxu0 %v1674
    %v1676 = vand.u32 %v98, 4294901760
    %v1677 = vsub.f32 %v98, %v1676
    %v1678 = vand.u32 %v1677, 4294901760
    %1679 = vmatpush1.msra.mxu0 %v1678
    %v1680 = vand.u32 %v101, 4294901760
    %v1681 = vsub.f32 %v101, %v1680
    %v1682 = vand.u32 %v1681, 4294901760
    %1683 = vmatprep.subr.mxu0 %v1682
    %v1684 = vand.u32 %v100, 4294901760
    %v1685 = vsub.f32 %v100, %v1684
    %v1686 = vand.u32 %v1685, 4294901760
    %1687 = vmatpush1.msra.mxu0 %v1686
    %v1688 = vand.u32 %v103, 4294901760
    %v1689 = vsub.f32 %v103, %v1688
    %v1690 = vand.u32 %v1689, 4294901760
    %1691 = vmatprep.subr.mxu0 %v1690
    %v1692 = vand.u32 %v102, 4294901760
    %v1693 = vsub.f32 %v102, %v1692
    %v1694 = vand.u32 %v1693, 4294901760
    %1695 = vmatpush1.msra.mxu0 %v1694
    %v1696 = vand.u32 %v105, 4294901760
    %v1697 = vsub.f32 %v105, %v1696
    %v1698 = vand.u32 %v1697, 4294901760
    %1699 = vmatprep.subr.mxu0 %v1698
    %v1700 = vand.u32 %v104, 4294901760
    %v1701 = vsub.f32 %v104, %v1700
    %v1702 = vand.u32 %v1701, 4294901760
    %1703 = vmatpush1.msra.mxu0 %v1702
    %1704 = vmatprep.subr.mxu0 0.0
    %1705 = vmatpush1.msra.mxu0 0.0
    %1706 = vmatprep.subr.mxu0 0.0
    %1707 = vmatpush1.msra.mxu0 0.0
    %1708 = vmatprep.subr.mxu0 0.0
    %1709 = vmatpush1.msra.mxu0 0.0
    %1710 = vmatprep.subr.mxu0 0.0
    %1711 = vmatpush1.msra.mxu0 0.0
    %1712 = vmatprep.subr.mxu0 0.0
    %1713 = vmatpush1.msra.mxu0 0.0
    %1714 = vmatprep.subr.mxu0 0.0
    %1715 = vmatpush1.msra.mxu0 0.0
    %1716 = vmatprep.subr.mxu0 0.0
    %1717 = vmatpush1.msra.mxu0 0.0
    %1718 = vmatprep.subr.mxu0 0.0
    %1719 = vmatpush1.msra.mxu0 0.0
    %1720 = vmatprep.subr.mxu0 0.0
    %1721 = vmatpush1.msra.mxu0 0.0
    %1722 = vmatprep.subr.mxu0 0.0
    %1723 = vmatpush1.msra.mxu0 0.0
    %1724 = vmatprep.subr.mxu0 0.0
    %1725 = vmatpush1.msra.mxu0 0.0
    %1726 = vmatprep.subr.mxu0 0.0
    %1727 = vmatpush1.msra.mxu0 0.0
    %1728 = vmatprep.subr.mxu0 0.0
    %1729 = vmatpush1.msra.mxu0 0.0
    %1730 = vmatprep.subr.mxu0 0.0
    %1731 = vmatpush1.msra.mxu0 0.0
    %1732 = vmatprep.subr.mxu0 0.0
    %1733 = vmatpush1.msra.mxu0 0.0
    %1734 = vmatprep.subr.mxu0 0.0
    %1735 = vmatpush1.msra.mxu0 0.0
    %1736 = vmatprep.mubr.f32.mxu0 0.0
    %v1737 = vand.u32 %v72, 4294901760
    %1738 = vmatmul.mubr.f32.gmra.mrb[0].mxu0 %v1737
    %v1739 = vpop.f32.mrb[0].mxu0
    %v1740 = vadd.f32 %v1572, %v1739
    %v1741 = vpop.f32.mrb[0].mxu0
    %v1742 = vadd.f32 %v1574, %v1741
    %1743 = vdwg.mxu0
    %v1744 = vand.u32 %v75, 4294901760
    %1745 = vmatprep.subr.mxu0 %v1744
    %v1746 = vand.u32 %v74, 4294901760
    %1747 = vmatpush1.msra.mxu0 %v1746
    %v1748 = vand.u32 %v77, 4294901760
    %1749 = vmatprep.subr.mxu0 %v1748
    %v1750 = vand.u32 %v76, 4294901760
    %1751 = vmatpush1.msra.mxu0 %v1750
    %v1752 = vand.u32 %v79, 4294901760
    %1753 = vmatprep.subr.mxu0 %v1752
    %v1754 = vand.u32 %v78, 4294901760
    %1755 = vmatpush1.msra.mxu0 %v1754
    %v1756 = vand.u32 %v81, 4294901760
    %1757 = vmatprep.subr.mxu0 %v1756
    %v1758 = vand.u32 %v80, 4294901760
    %1759 = vmatpush1.msra.mxu0 %v1758
    %v1760 = vand.u32 %v83, 4294901760
    %1761 = vmatprep.subr.mxu0 %v1760
    %v1762 = vand.u32 %v82, 4294901760
    %1763 = vmatpush1.msra.mxu0 %v1762
    %v1764 = vand.u32 %v85, 4294901760
    %1765 = vmatprep.subr.mxu0 %v1764
    %v1766 = vand.u32 %v84, 4294901760
    %1767 = vmatpush1.msra.mxu0 %v1766
    %v1768 = vand.u32 %v87, 4294901760
    %1769 = vmatprep.subr.mxu0 %v1768
    %v1770 = vand.u32 %v86, 4294901760
    %1771 = vmatpush1.msra.mxu0 %v1770
    %v1772 = vand.u32 %v89, 4294901760
    %1773 = vmatprep.subr.mxu0 %v1772
    %v1774 = vand.u32 %v88, 4294901760
    %1775 = vmatpush1.msra.mxu0 %v1774
    %v1776 = vand.u32 %v91, 4294901760
    %1777 = vmatprep.subr.mxu0 %v1776
    %v1778 = vand.u32 %v90, 4294901760
    %1779 = vmatpush1.msra.mxu0 %v1778
    %v1780 = vand.u32 %v93, 4294901760
    %1781 = vmatprep.subr.mxu0 %v1780
    %v1782 = vand.u32 %v92, 4294901760
    %1783 = vmatpush1.msra.mxu0 %v1782
    %v1784 = vand.u32 %v95, 4294901760
    %1785 = vmatprep.subr.mxu0 %v1784
    %v1786 = vand.u32 %v94, 4294901760
    %1787 = vmatpush1.msra.mxu0 %v1786
    %v1788 = vand.u32 %v97, 4294901760
    %1789 = vmatprep.subr.mxu0 %v1788
    %v1790 = vand.u32 %v96, 4294901760
    %1791 = vmatpush1.msra.mxu0 %v1790
    %v1792 = vand.u32 %v99, 4294901760
    %1793 = vmatprep.subr.mxu0 %v1792
    %v1794 = vand.u32 %v98, 4294901760
    %1795 = vmatpush1.msra.mxu0 %v1794
    %v1796 = vand.u32 %v101, 4294901760
    %1797 = vmatprep.subr.mxu0 %v1796
    %v1798 = vand.u32 %v100, 4294901760
    %1799 = vmatpush1.msra.mxu0 %v1798
    %v1800 = vand.u32 %v103, 4294901760
    %1801 = vmatprep.subr.mxu0 %v1800
    %v1802 = vand.u32 %v102, 4294901760
    %1803 = vmatpush1.msra.mxu0 %v1802
    %v1804 = vand.u32 %v105, 4294901760
    %1805 = vmatprep.subr.mxu0 %v1804
    %v1806 = vand.u32 %v104, 4294901760
    %1807 = vmatpush1.msra.mxu0 %v1806
    %1808 = vmatprep.subr.mxu0 0.0
    %1809 = vmatpush1.msra.mxu0 0.0
    %1810 = vmatprep.subr.mxu0 0.0
    %1811 = vmatpush1.msra.mxu0 0.0
    %1812 = vmatprep.subr.mxu0 0.0
    %1813 = vmatpush1.msra.mxu0 0.0
    %1814 = vmatprep.subr.mxu0 0.0
    %1815 = vmatpush1.msra.mxu0 0.0
    %1816 = vmatprep.subr.mxu0 0.0
    %1817 = vmatpush1.msra.mxu0 0.0
    %1818 = vmatprep.subr.mxu0 0.0
    %1819 = vmatpush1.msra.mxu0 0.0
    %1820 = vmatprep.subr.mxu0 0.0
    %1821 = vmatpush1.msra.mxu0 0.0
    %1822 = vmatprep.subr.mxu0 0.0
    %1823 = vmatpush1.msra.mxu0 0.0
    %1824 = vmatprep.subr.mxu0 0.0
    %1825 = vmatpush1.msra.mxu0 0.0
    %1826 = vmatprep.subr.mxu0 0.0
    %1827 = vmatpush1.msra.mxu0 0.0
    %1828 = vmatprep.subr.mxu0 0.0
    %1829 = vmatpush1.msra.mxu0 0.0
    %1830 = vmatprep.subr.mxu0 0.0
    %1831 = vmatpush1.msra.mxu0 0.0
    %1832 = vmatprep.subr.mxu0 0.0
    %1833 = vmatpush1.msra.mxu0 0.0
    %1834 = vmatprep.subr.mxu0 0.0
    %1835 = vmatpush1.msra.mxu0 0.0
    %1836 = vmatprep.subr.mxu0 0.0
    %1837 = vmatpush1.msra.mxu0 0.0
    %1838 = vmatprep.subr.mxu0 0.0
    %1839 = vmatpush1.msra.mxu0 0.0
    %1840 = vmatprep.mubr.f32.mxu0 0.0
    %v1841 = vand.u32 %v72, 4294901760
    %1842 = vmatmul.mubr.f32.gmra.mrb[0].mxu0 %v1841
    %v1843 = vpop.f32.mrb[0].mxu0
    %v1844 = vadd.f32 %v1740, %v1843
    %v1845 = vpop.f32.mrb[0].mxu0
    %v1846 = vadd.f32 %v1742, %v1845
    %1847 = vdwg.mxu0
    %v1848 = vld [vmem:[%s4] sm:$0x3]
    %v1850 = vlaneseq
    %v1851 = vshrl.u32 %v1850, 7
    %v1852 = vsub.s32 0, %v1851
    %v1853 = vrot.slane %v1848, %v1852
    %v1854 = vlaneseq
    %v1855 = vshrl.u32 %v1854, 7
    %v1856 = vsub.s32 1, %v1855
    %v1857 = vrot.slane %v1848, %v1856
    %v1860 = vadd.f32 %v1844, %v1853
    %v1861 = vadd.f32 %v1846, %v1857
    %v1862 = vtanh.pop %v1860
    %v1863 = vmul.f32 %v1861, 0.5
    %v1864 = vtanh.pop %v1863
    %v1865 = vmul.f32 %v1864, 0.5
    %v1866 = vadd.f32 %v1865, 0.5
    %v1867 = vsub.f32 %v1862, %v72
    %v1868 = vmul.f32 %v1866, %v1867
    %v1869 = vadd.f32 %v72, %v1868
    %1870 = vst [vmem:[#allocation10] sm:$0xff] %v1869
    // Predicated region
    $region38: #{tpu_custom_call.1} parent=1 // pred_check
      _
    $region39: #{tpu_custom_call.1} parent=1 // pred_check_branch
      %1872 = sbr.rel (0) target = $region41
    $region40: #{tpu_custom_call.1} parent=1 // pred_region
      %s1874 = ssub.s32 128, 128
      %1875 = vsyncadd [#allocation4], %s1874
      %s1877 = sshll.u32 [#allocation10], 4
      %s1878 = int_to_ptr.vmem [resolvable:$true] %s1877
      %1880 = dma.vmem_to_hbm [thread:$0]  %s1878, 128, %s5, [#allocation4]
    $region41: #{tpu_custom_call.1} parent=1 // pred_fallthru
      _
    // Predicated region
    $region42: #{tpu_custom_call.1} parent=1 // pred_check
      _
    $region43: #{tpu_custom_call.1} parent=1 // pred_check_branch
      %1882 = sbr.rel (0) target = $region45
    $region44: #{tpu_custom_call.1} parent=1 // pred_region
      %1883 = dma.done [#allocation4], 128
    $region45: #{tpu_custom_call.1} parent=1 // pred_fallthru
      _
    %1884 = vsyncpa [#allocation3], 1
    %1885 = vsyncpa [#allocation6], 1
    %1886 = vsyncpa [#allocation9], 1
    %1887 = vsyncpa [#allocation4], 1

</llo_original>
